<compile_context>
chip_gen: v6e
topology: v6e:2x2x1
jax: 0.10.0
libtpu: 0.0.40
codegen_flags: <defaults>
</compile_context>

<pallas_src>
import functools
import math

import jax
import jax.numpy as jnp
from jax.experimental import pallas as pl
from jax.experimental.pallas import tpu as pltpu

LANE = 128  # TPU lane width; pad feature/lane dims to a multiple of this.


def _round_up(x, m):
    return (x + m - 1) // m * m


# ----------------------------- Pallas kernel ------------------------------- #

def radio_alignment_kernel(ids_ref, emb_ref, w1_ref, b1_ref, w2_ref, b2_ref,
                           g_ref, be_ref, o_ref, *, p_real):
    """Fused row-tile: embedding gather + AlignmentLayer (eval mode)."""
    tm = o_ref.shape[0]
    vp = emb_ref.shape[0]

    # --- embedding gather fused as a one-hot matmul (stub pretrained encoder) ---
    ids = ids_ref[...]                                              # [tm, 1] i32
    lane_iota = jax.lax.broadcasted_iota(jnp.int32, (tm, vp), 1)
    onehot = jnp.where(lane_iota == ids, 1.0, 0.0).astype(jnp.bfloat16)
    x = jnp.dot(onehot, emb_ref[...],
                preferred_element_type=jnp.float32).astype(jnp.bfloat16)  # [tm, Hp]

    # --- linear_layer1 (bf16 MXU, f32 accumulate) + exact-erf GELU (f32) ---
    h = jnp.dot(x, w1_ref[...], preferred_element_type=jnp.float32) + b1_ref[...]
    inv_sqrt2 = jnp.float32(1.0 / math.sqrt(2.0))
    h = 0.5 * h * (1.0 + jax.lax.erf(h * inv_sqrt2))

    # --- linear_layer2 (bf16 MXU, f32 accumulate) ---
    y = jnp.dot(h.astype(jnp.bfloat16), w2_ref[...],
                preferred_element_type=jnp.float32) + b2_ref[...]          # [tm, Pp]

    # --- dropout: identity at inference time ---

    # --- LayerNorm over the real projection width, single reduction pass.
    # Padded lanes of y are exactly zero (zero-padded W2 columns / b2), so the
    # sums are already correct; divide by the real width, not the padded one.
    inv_p = jnp.float32(1.0 / p_real)
    s1 = jnp.sum(y, axis=-1, keepdims=True)
    s2 = jnp.sum(y * y, axis=-1, keepdims=True)
    mean = s1 * inv_p
    var = jnp.maximum(s2 * inv_p - mean * mean, 0.0)
    inv_std = jax.lax.rsqrt(var + jnp.float32(1e-5))

    o_ref[...] = ((y - mean) * inv_std * g_ref[...] + be_ref[...]).astype(o_ref.dtype)


# ------------------------- RadioEncoder wrapper ----------------------------- #

def init_params(key, vocab, hidden, proj):
    """Deterministic parameter init (PyTorch-style uniform bounds for linears)."""
    k_emb, k_w1, k_b1, k_w2, k_b2 = jax.random.split(key, 5)

    emb = jax.random.normal(k_emb, (vocab, hidden), jnp.float32) * 0.02

    bnd1 = 1.0 / math.sqrt(hidden)
    w1 = jax.random.uniform(k_w1, (hidden, proj), jnp.float32, -bnd1, bnd1)
    b1 = jax.random.uniform(k_b1, (1, proj), jnp.float32, -bnd1, bnd1)

    bnd2 = 1.0 / math.sqrt(proj)
    w2 = jax.random.uniform(k_w2, (proj, proj), jnp.float32, -bnd2, bnd2)
    b2 = jax.random.uniform(k_b2, (1, proj), jnp.float32, -bnd2, bnd2)

    gamma = jnp.ones((1, proj), jnp.float32)   # nn.LayerNorm default weight
    beta = jnp.zeros((1, proj), jnp.float32)   # nn.LayerNorm default bias
    return emb, w1, b1, w2, b2, gamma, beta


def radio_encoder_forward(token_ids, params, *, tm=256):
    """Full RadioEncoder.forward: stub encoder + AlignmentLayer, one fused kernel.

    tm: row tile. 256 matches the v6e/v7x 2x256x256 MXU; use 128 on v5e.
    """
    emb, w1, b1, w2, b2, gamma, beta = params
    B, S = token_ids.shape
    V, H = emb.shape
    P = w1.shape[1]

    N = B * S
    Np = _round_up(N, tm)          # row padding instead of `assert N % tm == 0`
    Vp = _round_up(V, LANE)
    Hp = _round_up(H, LANE)
    Pp = _round_up(P, LANE)

    ids = jnp.pad(token_ids.reshape(N).astype(jnp.int32), (0, Np - N))
    ids = ids.reshape(Np, 1)

    # Zero-pad weights to lane-dense shapes; matmul weights are cast to bf16
    # (MXU-native on v5e/v6e/v7x) — accumulation stays f32 inside the kernel.
    emb_p = jnp.pad(emb, ((0, Vp - V), (0, Hp - H))).astype(jnp.bfloat16)
    w1_p = jnp.pad(w1, ((0, Hp - H), (0, Pp - P))).astype(jnp.bfloat16)
    w2_p = jnp.pad(w2, ((0, Pp - P), (0, Pp - P))).astype(jnp.bfloat16)
    b1_p = jnp.pad(b1, ((0, 0), (0, Pp - P)))
    b2_p = jnp.pad(b2, ((0, 0), (0, Pp - P)))
    g_p = jnp.pad(gamma, ((0, 0), (0, Pp - P)))
    be_p = jnp.pad(beta, ((0, 0), (0, Pp - P)))

    grid = (Np // tm,)
    kernel = functools.partial(radio_alignment_kernel, p_real=P)

    out = pl.pallas_call(
        kernel,
        out_shape=jax.ShapeDtypeStruct((Np, Pp), jnp.float32),
        grid_spec=pltpu.PrefetchScalarGridSpec(
            num_scalar_prefetch=0,
            grid=grid,
            in_specs=[
                pl.BlockSpec((tm, 1), lambda i: (i, 0)),     # token ids (per tile)
                pl.BlockSpec((Vp, Hp), lambda i: (0, 0)),    # embedding table (bf16)
                pl.BlockSpec((Hp, Pp), lambda i: (0, 0)),    # W1 (bf16, pre-transposed)
                pl.BlockSpec((1, Pp), lambda i: (0, 0)),     # b1
                pl.BlockSpec((Pp, Pp), lambda i: (0, 0)),    # W2 (bf16, pre-transposed)
                pl.BlockSpec((1, Pp), lambda i: (0, 0)),     # b2
                pl.BlockSpec((1, Pp), lambda i: (0, 0)),     # LayerNorm gamma
                pl.BlockSpec((1, Pp), lambda i: (0, 0)),     # LayerNorm beta
            ],
            out_specs=pl.BlockSpec((tm, Pp), lambda i: (i, 0)),
        ),
        compiler_params=pltpu.CompilerParams(
            dimension_semantics=("parallel",),
            vmem_limit_bytes=48 * 1024 * 1024,   # fits v7x's 64 MiB, > v5e/v6e defaults
        ),
    )(ids, emb_p, w1_p, b1_p, w2_p, b2_p, g_p, be_p)

    return out[:N, :P].reshape(B, S, P)


def alignment_layer_ref(x2d, w1, b1, w2, b2, gamma, beta):
    """Plain-JAX f32 reference (PyTorch semantics) for correctness check."""
    h = x2d @ w1 + b1
    h = 0.5 * h * (1.0 + jax.lax.erf(h / jnp.sqrt(2.0)))
    y = h @ w2 + b2
    mean = jnp.mean(y, axis=-1, keepdims=True)
    var = jnp.mean((y - mean) ** 2, axis=-1, keepdims=True)
    return (y - mean) / jnp.sqrt(var + 1e-5) * gamma + beta


if __name__ == "__main__":
    # Small deterministic shapes: batch=2, seq=8, hidden=32, projection_dim=32
    B, S, VOCAB, HIDDEN, PROJ = 2, 8, 50, 32, 32

    key = jax.random.PRNGKey(0)
    k_tok, k_par = jax.random.split(key)

    token_ids = jax.random.randint(k_tok, (B, S), 0, VOCAB, dtype=jnp.int32)
    params = init_params(k_par, VOCAB, HIDDEN, PROJ)

    out = radio_encoder_forward(token_ids, params, tm=256)
    out = jax.block_until_ready(out)
    assert out.shape == (B, S, PROJ), out.shape

    # Cross-check Pallas kernel against the plain-JAX f32 reference.
    # Tolerance relaxed vs the pure-f32 path because matmul inputs are bf16
    # (f32 accumulation); LayerNorm keeps outputs O(1), so errors stay ~1e-2.
    emb, w1, b1, w2, b2, gamma, beta = params
    x2d = jnp.take(emb, token_ids, axis=0).reshape(B * S, HIDDEN)
    ref = alignment_layer_ref(x2d, w1, b1, w2, b2, gamma, beta).reshape(B, S, PROJ)
    assert jnp.allclose(out, ref, atol=5e-2, rtol=5e-2), "mismatch vs reference"

    print("KERNEL_OK")
</pallas_src>

<mosaic_0001>
module attributes {stable_mosaic.version = 11 : i64} {
  func.func @radio_alignment_kernel(%arg0: i32, %arg1: memref<256x1xi32, #tpu.memory_space<vmem>>, %arg2: memref<128x128xbf16, #tpu.memory_space<vmem>>, %arg3: memref<128x128xbf16, #tpu.memory_space<vmem>>, %arg4: memref<1x128xf32, #tpu.memory_space<vmem>>, %arg5: memref<128x128xbf16, #tpu.memory_space<vmem>>, %arg6: memref<1x128xf32, #tpu.memory_space<vmem>>, %arg7: memref<1x128xf32, #tpu.memory_space<vmem>>, %arg8: memref<1x128xf32, #tpu.memory_space<vmem>>, %arg9: memref<256x128xf32, #tpu.memory_space<vmem>>) attributes {dimension_semantics = [#tpu.dimension_semantics<parallel>], iteration_bounds = array<i64: 1>, scalar_prefetch = 0 : i64, scratch_operands = 0 : i64, tpu.core_type = #tpu.core_type<tc>, window_params = [{transform_indices = @transform_0, window_bounds = array<i64: 256, 1>}, {pipeline_mode = #tpu.pipeline_mode<synchronous>, transform_indices = @transform_1, window_bounds = array<i64: 128, 128>}, {pipeline_mode = #tpu.pipeline_mode<synchronous>, transform_indices = @transform_2, window_bounds = array<i64: 128, 128>}, {pipeline_mode = #tpu.pipeline_mode<synchronous>, transform_indices = @transform_3, window_bounds = array<i64: 1, 128>}, {pipeline_mode = #tpu.pipeline_mode<synchronous>, transform_indices = @transform_4, window_bounds = array<i64: 128, 128>}, {pipeline_mode = #tpu.pipeline_mode<synchronous>, transform_indices = @transform_5, window_bounds = array<i64: 1, 128>}, {pipeline_mode = #tpu.pipeline_mode<synchronous>, transform_indices = @transform_6, window_bounds = array<i64: 1, 128>}, {pipeline_mode = #tpu.pipeline_mode<synchronous>, transform_indices = @transform_7, window_bounds = array<i64: 1, 128>}, {transform_indices = @transform_8, window_bounds = array<i64: 256, 128>}]} {
    %c0 = arith.constant 0 : index
    %c0_0 = arith.constant 0 : index
    %0 = vector.load %arg1[%c0, %c0_0] : memref<256x1xi32, #tpu.memory_space<vmem>>, vector<256x1xi32>
    %1 = tpu.iota {dimensions = array<i32: 1>} : vector<256x128xi32>
    %2 = vector.broadcast %0 : vector<256x1xi32> to vector<256x128xi32>
    %3 = arith.cmpi eq, %1, %2 : vector<256x128xi32>
    %cst = arith.constant 1.000000e+00 : f32
    %cst_1 = arith.constant 0.000000e+00 : f32
    %4 = vector.broadcast %cst : f32 to vector<256x128xf32>
    %5 = vector.broadcast %cst_1 : f32 to vector<256x128xf32>
    %6 = arith.select %3, %4, %5 : vector<256x128xi1>, vector<256x128xf32>
    %7 = arith.truncf %6 : vector<256x128xf32> to vector<256x128xbf16>
    %c0_2 = arith.constant 0 : index
    %c0_3 = arith.constant 0 : index
    %8 = vector.load %arg2[%c0_2, %c0_3] : memref<128x128xbf16, #tpu.memory_space<vmem>>, vector<128x128xbf16>
    %cst_4 = arith.constant dense<0.000000e+00> : vector<256x128xf32>
    %9 = tpu.matmul %7, %8, %cst_4 {dimension_numbers = #tpu.dot_dimension_numbers<[1], [0], [0], [1], [0, 0, 1, 1], [], []>} : vector<256x128xbf16>, vector<128x128xbf16>, vector<256x128xf32> -> vector<256x128xf32>
    %10 = arith.truncf %9 : vector<256x128xf32> to vector<256x128xbf16>
    %c0_5 = arith.constant 0 : index
    %c0_6 = arith.constant 0 : index
    %11 = vector.load %arg3[%c0_5, %c0_6] : memref<128x128xbf16, #tpu.memory_space<vmem>>, vector<128x128xbf16>
    %cst_7 = arith.constant dense<0.000000e+00> : vector<256x128xf32>
    %12 = tpu.matmul %10, %11, %cst_7 {dimension_numbers = #tpu.dot_dimension_numbers<[1], [0], [0], [1], [0, 0, 1, 1], [], []>} : vector<256x128xbf16>, vector<128x128xbf16>, vector<256x128xf32> -> vector<256x128xf32>
    %c0_8 = arith.constant 0 : index
    %c0_9 = arith.constant 0 : index
    %13 = vector.load %arg4[%c0_8, %c0_9] : memref<1x128xf32, #tpu.memory_space<vmem>>, vector<1x128xf32>
    %14 = vector.broadcast %13 : vector<1x128xf32> to vector<256x128xf32>
    %15 = arith.addf %12, %14 : vector<256x128xf32>
    %cst_10 = arith.constant 5.000000e-01 : f32
    %16 = vector.broadcast %cst_10 : f32 to vector<256x128xf32>
    %17 = arith.mulf %16, %15 : vector<256x128xf32>
    %cst_11 = arith.constant 0.707106769 : f32
    %18 = vector.broadcast %cst_11 : f32 to vector<256x128xf32>
    %19 = arith.mulf %15, %18 : vector<256x128xf32>
    %20 = math.erf %19 : vector<256x128xf32>
    %cst_12 = arith.constant 1.000000e+00 : f32
    %21 = vector.broadcast %cst_12 : f32 to vector<256x128xf32>
    %22 = arith.addf %21, %20 : vector<256x128xf32>
    %23 = arith.mulf %17, %22 : vector<256x128xf32>
    %24 = arith.truncf %23 : vector<256x128xf32> to vector<256x128xbf16>
    %c0_13 = arith.constant 0 : index
    %c0_14 = arith.constant 0 : index
    %25 = vector.load %arg5[%c0_13, %c0_14] : memref<128x128xbf16, #tpu.memory_space<vmem>>, vector<128x128xbf16>
    %cst_15 = arith.constant dense<0.000000e+00> : vector<256x128xf32>
    %26 = tpu.matmul %24, %25, %cst_15 {dimension_numbers = #tpu.dot_dimension_numbers<[1], [0], [0], [1], [0, 0, 1, 1], [], []>} : vector<256x128xbf16>, vector<128x128xbf16>, vector<256x128xf32> -> vector<256x128xf32>
    %c0_16 = arith.constant 0 : index
    %c0_17 = arith.constant 0 : index
    %27 = vector.load %arg6[%c0_16, %c0_17] : memref<1x128xf32, #tpu.memory_space<vmem>>, vector<1x128xf32>
    %28 = vector.broadcast %27 : vector<1x128xf32> to vector<256x128xf32>
    %29 = arith.addf %26, %28 : vector<256x128xf32>
    %cst_18 = arith.constant dense<0.000000e+00> : vector<256xf32>
    %30 = vector.multi_reduction <add>, %29, %cst_18 [1] : vector<256x128xf32> to vector<256xf32>
    %31 = vector.shape_cast %30 : vector<256xf32> to vector<256x1xf32>
    %32 = arith.mulf %29, %29 : vector<256x128xf32>
    %cst_19 = arith.constant dense<0.000000e+00> : vector<256xf32>
    %33 = vector.multi_reduction <add>, %32, %cst_19 [1] : vector<256x128xf32> to vector<256xf32>
    %34 = vector.shape_cast %33 : vector<256xf32> to vector<256x1xf32>
    %cst_20 = arith.constant 3.125000e-02 : f32
    %35 = vector.broadcast %cst_20 : f32 to vector<256x1xf32>
    %36 = arith.mulf %31, %35 : vector<256x1xf32>
    %cst_21 = arith.constant 3.125000e-02 : f32
    %37 = vector.broadcast %cst_21 : f32 to vector<256x1xf32>
    %38 = arith.mulf %34, %37 : vector<256x1xf32>
    %39 = arith.mulf %36, %36 : vector<256x1xf32>
    %40 = arith.subf %38, %39 : vector<256x1xf32>
    %cst_22 = arith.constant 0.000000e+00 : f32
    %41 = vector.broadcast %cst_22 : f32 to vector<256x1xf32>
    %42 = arith.maximumf %40, %41 : vector<256x1xf32>
    %cst_23 = arith.constant 9.99999974E-6 : f32
    %43 = vector.broadcast %cst_23 : f32 to vector<256x1xf32>
    %44 = arith.addf %42, %43 : vector<256x1xf32>
    %45 = math.rsqrt %44 : vector<256x1xf32>
    %46 = vector.broadcast %36 : vector<256x1xf32> to vector<256x128xf32>
    %47 = arith.subf %29, %46 : vector<256x128xf32>
    %48 = vector.broadcast %45 : vector<256x1xf32> to vector<256x128xf32>
    %49 = arith.mulf %47, %48 : vector<256x128xf32>
    %c0_24 = arith.constant 0 : index
    %c0_25 = arith.constant 0 : index
    %50 = vector.load %arg7[%c0_24, %c0_25] : memref<1x128xf32, #tpu.memory_space<vmem>>, vector<1x128xf32>
    %51 = vector.broadcast %50 : vector<1x128xf32> to vector<256x128xf32>
    %52 = arith.mulf %49, %51 : vector<256x128xf32>
    %c0_26 = arith.constant 0 : index
    %c0_27 = arith.constant 0 : index
    %53 = vector.load %arg8[%c0_26, %c0_27] : memref<1x128xf32, #tpu.memory_space<vmem>>, vector<1x128xf32>
    %54 = vector.broadcast %53 : vector<1x128xf32> to vector<256x128xf32>
    %55 = arith.addf %52, %54 : vector<256x128xf32>
    %c0_28 = arith.constant 0 : index
    %c0_29 = arith.constant 0 : index
    %56 = vector.load %arg9[%c0_28, %c0_29] : memref<256x128xf32, #tpu.memory_space<vmem>>, vector<256x128xf32>
    tpu.vector_store %arg9[%c0_28, %c0_29], %55 {strides = array<i32>} : memref<256x128xf32, #tpu.memory_space<vmem>>, vector<256x128xf32>,
    return
  }
  func.func @transform_0(%arg0: i32) -> (i32, i32) {
    %c0_i32 = arith.constant 0 : i32
    %c0_i32_0 = arith.constant 0 : i32
    return %arg0, %c0_i32 : i32, i32
  }
  func.func @transform_1(%arg0: i32) -> (i32, i32) {
    %c0_i32 = arith.constant 0 : i32
    %c0_i32_0 = arith.constant 0 : i32
    %c0_i32_1 = arith.constant 0 : i32
    return %c0_i32, %c0_i32_0 : i32, i32
  }
  func.func @transform_2(%arg0: i32) -> (i32, i32) {
    %c0_i32 = arith.constant 0 : i32
    %c0_i32_0 = arith.constant 0 : i32
    %c0_i32_1 = arith.constant 0 : i32
    return %c0_i32, %c0_i32_0 : i32, i32
  }
  func.func @transform_3(%arg0: i32) -> (i32, i32) {
    %c0_i32 = arith.constant 0 : i32
    %c0_i32_0 = arith.constant 0 : i32
    %c0_i32_1 = arith.constant 0 : i32
    return %c0_i32, %c0_i32_0 : i32, i32
  }
  func.func @transform_4(%arg0: i32) -> (i32, i32) {
    %c0_i32 = arith.constant 0 : i32
    %c0_i32_0 = arith.constant 0 : i32
    %c0_i32_1 = arith.constant 0 : i32
    return %c0_i32, %c0_i32_0 : i32, i32
  }
  func.func @transform_5(%arg0: i32) -> (i32, i32) {
    %c0_i32 = arith.constant 0 : i32
    %c0_i32_0 = arith.constant 0 : i32
    %c0_i32_1 = arith.constant 0 : i32
    return %c0_i32, %c0_i32_0 : i32, i32
  }
  func.func @transform_6(%arg0: i32) -> (i32, i32) {
    %c0_i32 = arith.constant 0 : i32
    %c0_i32_0 = arith.constant 0 : i32
    %c0_i32_1 = arith.constant 0 : i32
    return %c0_i32, %c0_i32_0 : i32, i32
  }
  func.func @transform_7(%arg0: i32) -> (i32, i32) {
    %c0_i32 = arith.constant 0 : i32
    %c0_i32_0 = arith.constant 0 : i32
    %c0_i32_1 = arith.constant 0 : i32
    return %c0_i32, %c0_i32_0 : i32, i32
  }
  func.func @transform_8(%arg0: i32) -> (i32, i32) {
    %c0_i32 = arith.constant 0 : i32
    %c0_i32_0 = arith.constant 0 : i32
    return %arg0, %c0_i32 : i32, i32
  }
}

</mosaic_0001>

<llo_original>
// kernel: tpu_custom_call.1
$region0: #{tpu_custom_call.1}
  #allocation0 [shape = 'u32[]', space=smem, size = 0x4, offset = 0x4, fixed_abs, tag = 'smem constant byte address 0x4 - core index']
  #allocation1 [shape = 'u32[144,128]{1,0:T(1,128)}', space=vmem, size = 0x12000, scoped, tag = 'internal scratch']
  %s0 = inlined_call_operand.vmem [shape: s32[256,1], index: 0, kind: input, shape index: {}]
  %s1 = inlined_call_operand.vmem [shape: bf16[128,128], index: 1, kind: input, shape index: {}]
  %s2 = inlined_call_operand.vmem [shape: bf16[128,128], index: 2, kind: input, shape index: {}]
  %s3 = inlined_call_operand.vmem [shape: f32[1,128], index: 3, kind: input, shape index: {}]
  %s4 = inlined_call_operand.vmem [shape: bf16[128,128], index: 4, kind: input, shape index: {}]
  %s5 = inlined_call_operand.vmem [shape: f32[1,128], index: 5, kind: input, shape index: {}]
  %s6 = inlined_call_operand.vmem [shape: f32[1,128], index: 6, kind: input, shape index: {}]
  %s7 = inlined_call_operand.vmem [shape: f32[1,128], index: 7, kind: input, shape index: {}]
  %s8 = inlined_call_operand.hbm [shape: f32[256,128], index: 8, kind: output, shape index: {}]
  %s9 = sld [smem:[#allocation0]]
  $region42: #{tpu_custom_call.1} parent=0
    _
  %s11 = ssub.s32 1, %s9
  %s12 = scalar_select 0, %s11, %s9
  $region1: #{tpu_custom_call.1} parent=0
    #allocation2 [shape = 'u8[131072]{0}', space=vmem, size = 0x20000, scoped, tag = 'output window, operand 0, single buffered']
    #allocation3 [shape = 's32[1]{0}', space=sflag, size = 0x4, scoped, tag = 'scoped memory for tpu_custom_call.1']
    %13 = vsyncpa [#allocation3], 0
    // Predicated region
    $region2: #{tpu_custom_call.1} parent=1 // pred_check
      _
    $region3: #{tpu_custom_call.1} parent=1 // pred_check_branch
      %15 = sbr.rel (0) target = $region5
    $region4: #{tpu_custom_call.1} parent=1 // pred_region
      _
    $region5: #{tpu_custom_call.1} parent=1 // pred_fallthru
      _
    // Predicated region
    $region6: #{tpu_custom_call.1} parent=1 // pred_check
      _
    $region7: #{tpu_custom_call.1} parent=1 // pred_check_branch
      %17 = sbr.rel (0) target = $region9
    $region8: #{tpu_custom_call.1} parent=1 // pred_region
      _
    $region9: #{tpu_custom_call.1} parent=1 // pred_fallthru
      _
    // Predicated region
    $region10: #{tpu_custom_call.1} parent=1 // pred_check
      _
    $region11: #{tpu_custom_call.1} parent=1 // pred_check_branch
      %19 = sbr.rel (0) target = $region13
    $region12: #{tpu_custom_call.1} parent=1 // pred_region
      _
    $region13: #{tpu_custom_call.1} parent=1 // pred_fallthru
      _
    // Predicated region
    $region14: #{tpu_custom_call.1} parent=1 // pred_check
      _
    $region15: #{tpu_custom_call.1} parent=1 // pred_check_branch
      %21 = sbr.rel (0) target = $region17
    $region16: #{tpu_custom_call.1} parent=1 // pred_region
      _
    $region17: #{tpu_custom_call.1} parent=1 // pred_fallthru
      _
    // Predicated region
    $region18: #{tpu_custom_call.1} parent=1 // pred_check
      _
    $region19: #{tpu_custom_call.1} parent=1 // pred_check_branch
      %23 = sbr.rel (0) target = $region21
    $region20: #{tpu_custom_call.1} parent=1 // pred_region
      _
    $region21: #{tpu_custom_call.1} parent=1 // pred_fallthru
      _
    // Predicated region
    $region22: #{tpu_custom_call.1} parent=1 // pred_check
      _
    $region23: #{tpu_custom_call.1} parent=1 // pred_check_branch
      %25 = sbr.rel (0) target = $region25
    $region24: #{tpu_custom_call.1} parent=1 // pred_region
      _
    $region25: #{tpu_custom_call.1} parent=1 // pred_fallthru
      _
    // Predicated region
    $region26: #{tpu_custom_call.1} parent=1 // pred_check
      _
    $region27: #{tpu_custom_call.1} parent=1 // pred_check_branch
      %27 = sbr.rel (0) target = $region29
    $region28: #{tpu_custom_call.1} parent=1 // pred_region
      _
    $region29: #{tpu_custom_call.1} parent=1 // pred_fallthru
      _
    // Predicated region
    $region30: #{tpu_custom_call.1} parent=1 // pred_check
      _
    $region31: #{tpu_custom_call.1} parent=1 // pred_check_branch
      %29 = sbr.rel (0) target = $region33
    $region32: #{tpu_custom_call.1} parent=1 // pred_region
      _
    $region33: #{tpu_custom_call.1} parent=1 // pred_fallthru
      _
    %v31 = vld [vmem:[%s0] sm:$0xff]
    %v32 = vld [vmem:[%s0 + $0x8] sm:$0xff]
    %v33 = vld [vmem:[%s0 + $0x10] sm:$0xff]
    %v34 = vld [vmem:[%s0 + $0x18] sm:$0xff]
    %v35 = vld [vmem:[%s0 + $0x20] sm:$0xff]
    %v36 = vld [vmem:[%s0 + $0x28] sm:$0xff]
    %v37 = vld [vmem:[%s0 + $0x30] sm:$0xff]
    %v38 = vld [vmem:[%s0 + $0x38] sm:$0xff]
    %v39 = vld [vmem:[%s0 + $0x40] sm:$0xff]
    %v40 = vld [vmem:[%s0 + $0x48] sm:$0xff]
    %v41 = vld [vmem:[%s0 + $0x50] sm:$0xff]
    %v42 = vld [vmem:[%s0 + $0x58] sm:$0xff]
    %v43 = vld [vmem:[%s0 + $0x60] sm:$0xff]
    %v44 = vld [vmem:[%s0 + $0x68] sm:$0xff]
    %v45 = vld [vmem:[%s0 + $0x70] sm:$0xff]
    %v46 = vld [vmem:[%s0 + $0x78] sm:$0xff]
    %v47 = vld [vmem:[%s0 + $0x80] sm:$0xff]
    %v48 = vld [vmem:[%s0 + $0x88] sm:$0xff]
    %v49 = vld [vmem:[%s0 + $0x90] sm:$0xff]
    %v50 = vld [vmem:[%s0 + $0x98] sm:$0xff]
    %v51 = vld [vmem:[%s0 + $0xa0] sm:$0xff]
    %v52 = vld [vmem:[%s0 + $0xa8] sm:$0xff]
    %v53 = vld [vmem:[%s0 + $0xb0] sm:$0xff]
    %v54 = vld [vmem:[%s0 + $0xb8] sm:$0xff]
    %v55 = vld [vmem:[%s0 + $0xc0] sm:$0xff]
    %v56 = vld [vmem:[%s0 + $0xc8] sm:$0xff]
    %v57 = vld [vmem:[%s0 + $0xd0] sm:$0xff]
    %v58 = vld [vmem:[%s0 + $0xd8] sm:$0xff]
    %v59 = vld [vmem:[%s0 + $0xe0] sm:$0xff]
    %v60 = vld [vmem:[%s0 + $0xe8] sm:$0xff]
    %v61 = vld [vmem:[%s0 + $0xf0] sm:$0xff]
    %v62 = vld [vmem:[%s0 + $0xf8] sm:$0xff]
    %v63 = vlaneseq
    %v64 = vand.u32 %v63, 127
    %65 = vset.pattern.permute.xlu0 0
    %66 = vperm.xlu0 %65, %v31
    %v67 = vpop.permute.xlu0 %66
    %68 = vset.pattern.permute.xlu0 0
    %69 = vperm.xlu0 %68, %v32
    %v70 = vpop.permute.xlu0 %69
    %71 = vset.pattern.permute.xlu0 0
    %72 = vperm.xlu0 %71, %v33
    %v73 = vpop.permute.xlu0 %72
    %74 = vset.pattern.permute.xlu0 0
    %75 = vperm.xlu0 %74, %v34
    %v76 = vpop.permute.xlu0 %75
    %77 = vset.pattern.permute.xlu0 0
    %78 = vperm.xlu0 %77, %v35
    %v79 = vpop.permute.xlu0 %78
    %80 = vset.pattern.permute.xlu0 0
    %81 = vperm.xlu0 %80, %v36
    %v82 = vpop.permute.xlu0 %81
    %83 = vset.pattern.permute.xlu0 0
    %84 = vperm.xlu0 %83, %v37
    %v85 = vpop.permute.xlu0 %84
    %86 = vset.pattern.permute.xlu0 0
    %87 = vperm.xlu0 %86, %v38
    %v88 = vpop.permute.xlu0 %87
    %89 = vset.pattern.permute.xlu0 0
    %90 = vperm.xlu0 %89, %v39
    %v91 = vpop.permute.xlu0 %90
    %92 = vset.pattern.permute.xlu0 0
    %93 = vperm.xlu0 %92, %v40
    %v94 = vpop.permute.xlu0 %93
    %95 = vset.pattern.permute.xlu0 0
    %96 = vperm.xlu0 %95, %v41
    %v97 = vpop.permute.xlu0 %96
    %98 = vset.pattern.permute.xlu0 0
    %99 = vperm.xlu0 %98, %v42
    %v100 = vpop.permute.xlu0 %99
    %101 = vset.pattern.permute.xlu0 0
    %102 = vperm.xlu0 %101, %v43
    %v103 = vpop.permute.xlu0 %102
    %104 = vset.pattern.permute.xlu0 0
    %105 = vperm.xlu0 %104, %v44
    %v106 = vpop.permute.xlu0 %105
    %107 = vset.pattern.permute.xlu0 0
    %108 = vperm.xlu0 %107, %v45
    %v109 = vpop.permute.xlu0 %108
    %110 = vset.pattern.permute.xlu0 0
    %111 = vperm.xlu0 %110, %v46
    %v112 = vpop.permute.xlu0 %111
    %113 = vset.pattern.permute.xlu0 0
    %114 = vperm.xlu0 %113, %v47
    %v115 = vpop.permute.xlu0 %114
    %116 = vset.pattern.permute.xlu0 0
    %117 = vperm.xlu0 %116, %v48
    %v118 = vpop.permute.xlu0 %117
    %119 = vset.pattern.permute.xlu0 0
    %120 = vperm.xlu0 %119, %v49
    %v121 = vpop.permute.xlu0 %120
    %122 = vset.pattern.permute.xlu0 0
    %123 = vperm.xlu0 %122, %v50
    %v124 = vpop.permute.xlu0 %123
    %125 = vset.pattern.permute.xlu0 0
    %126 = vperm.xlu0 %125, %v51
    %v127 = vpop.permute.xlu0 %126
    %128 = vset.pattern.permute.xlu0 0
    %129 = vperm.xlu0 %128, %v52
    %v130 = vpop.permute.xlu0 %129
    %131 = vset.pattern.permute.xlu0 0
    %132 = vperm.xlu0 %131, %v53
    %v133 = vpop.permute.xlu0 %132
    %134 = vset.pattern.permute.xlu0 0
    %135 = vperm.xlu0 %134, %v54
    %v136 = vpop.permute.xlu0 %135
    %137 = vset.pattern.permute.xlu0 0
    %138 = vperm.xlu0 %137, %v55
    %v139 = vpop.permute.xlu0 %138
    %140 = vset.pattern.permute.xlu0 0
    %141 = vperm.xlu0 %140, %v56
    %v142 = vpop.permute.xlu0 %141
    %143 = vset.pattern.permute.xlu0 0
    %144 = vperm.xlu0 %143, %v57
    %v145 = vpop.permute.xlu0 %144
    %146 = vset.pattern.permute.xlu0 0
    %147 = vperm.xlu0 %146, %v58
    %v148 = vpop.permute.xlu0 %147
    %149 = vset.pattern.permute.xlu0 0
    %150 = vperm.xlu0 %149, %v59
    %v151 = vpop.permute.xlu0 %150
    %152 = vset.pattern.permute.xlu0 0
    %153 = vperm.xlu0 %152, %v60
    %v154 = vpop.permute.xlu0 %153
    %155 = vset.pattern.permute.xlu0 0
    %156 = vperm.xlu0 %155, %v61
    %v157 = vpop.permute.xlu0 %156
    %158 = vset.pattern.permute.xlu0 0
    %159 = vperm.xlu0 %158, %v62
    %v160 = vpop.permute.xlu0 %159
    %vm161 = vcmp.eq.s32.totalorder %v64, %v67
    %vm162 = vcmp.eq.s32.totalorder %v64, %v70
    %vm163 = vcmp.eq.s32.totalorder %v64, %v73
    %vm164 = vcmp.eq.s32.totalorder %v64, %v76
    %vm165 = vcmp.eq.s32.totalorder %v64, %v79
    %vm166 = vcmp.eq.s32.totalorder %v64, %v82
    %vm167 = vcmp.eq.s32.totalorder %v64, %v85
    %vm168 = vcmp.eq.s32.totalorder %v64, %v88
    %vm169 = vcmp.eq.s32.totalorder %v64, %v91
    %vm170 = vcmp.eq.s32.totalorder %v64, %v94
    %vm171 = vcmp.eq.s32.totalorder %v64, %v97
    %vm172 = vcmp.eq.s32.totalorder %v64, %v100
    %vm173 = vcmp.eq.s32.totalorder %v64, %v103
    %vm174 = vcmp.eq.s32.totalorder %v64, %v106
    %vm175 = vcmp.eq.s32.totalorder %v64, %v109
    %vm176 = vcmp.eq.s32.totalorder %v64, %v112
    %vm177 = vcmp.eq.s32.totalorder %v64, %v115
    %vm178 = vcmp.eq.s32.totalorder %v64, %v118
    %vm179 = vcmp.eq.s32.totalorder %v64, %v121
    %vm180 = vcmp.eq.s32.totalorder %v64, %v124
    %vm181 = vcmp.eq.s32.totalorder %v64, %v127
    %vm182 = vcmp.eq.s32.totalorder %v64, %v130
    %vm183 = vcmp.eq.s32.totalorder %v64, %v133
    %vm184 = vcmp.eq.s32.totalorder %v64, %v136
    %vm185 = vcmp.eq.s32.totalorder %v64, %v139
    %vm186 = vcmp.eq.s32.totalorder %v64, %v142
    %vm187 = vcmp.eq.s32.totalorder %v64, %v145
    %vm188 = vcmp.eq.s32.totalorder %v64, %v148
    %vm189 = vcmp.eq.s32.totalorder %v64, %v151
    %vm190 = vcmp.eq.s32.totalorder %v64, %v154
    %vm191 = vcmp.eq.s32.totalorder %v64, %v157
    %vm192 = vcmp.eq.s32.totalorder %v64, %v160
    %v193 = vsel %vm161, 1.0, 0.0
    %v194 = vsel %vm162, 1.0, 0.0
    %v195 = vsel %vm163, 1.0, 0.0
    %v196 = vsel %vm164, 1.0, 0.0
    %v197 = vsel %vm165, 1.0, 0.0
    %v198 = vsel %vm166, 1.0, 0.0
    %v199 = vsel %vm167, 1.0, 0.0
    %v200 = vsel %vm168, 1.0, 0.0
    %v201 = vsel %vm169, 1.0, 0.0
    %v202 = vsel %vm170, 1.0, 0.0
    %v203 = vsel %vm171, 1.0, 0.0
    %v204 = vsel %vm172, 1.0, 0.0
    %v205 = vsel %vm173, 1.0, 0.0
    %v206 = vsel %vm174, 1.0, 0.0
    %v207 = vsel %vm175, 1.0, 0.0
    %v208 = vsel %vm176, 1.0, 0.0
    %v209 = vsel %vm177, 1.0, 0.0
    %v210 = vsel %vm178, 1.0, 0.0
    %v211 = vsel %vm179, 1.0, 0.0
    %v212 = vsel %vm180, 1.0, 0.0
    %v213 = vsel %vm181, 1.0, 0.0
    %v214 = vsel %vm182, 1.0, 0.0
    %v215 = vsel %vm183, 1.0, 0.0
    %v216 = vsel %vm184, 1.0, 0.0
    %v217 = vsel %vm185, 1.0, 0.0
    %v218 = vsel %vm186, 1.0, 0.0
    %v219 = vsel %vm187, 1.0, 0.0
    %v220 = vsel %vm188, 1.0, 0.0
    %v221 = vsel %vm189, 1.0, 0.0
    %v222 = vsel %vm190, 1.0, 0.0
    %v223 = vsel %vm191, 1.0, 0.0
    %v224 = vsel %vm192, 1.0, 0.0
    %v225 = vpack.c.bf16 %v194, %v193
    %v226 = vpack.c.bf16 %v196, %v195
    %v227 = vpack.c.bf16 %v198, %v197
    %v228 = vpack.c.bf16 %v200, %v199
    %v229 = vpack.c.bf16 %v202, %v201
    %v230 = vpack.c.bf16 %v204, %v203
    %v231 = vpack.c.bf16 %v206, %v205
    %v232 = vpack.c.bf16 %v208, %v207
    %v233 = vpack.c.bf16 %v210, %v209
    %v234 = vpack.c.bf16 %v212, %v211
    %v235 = vpack.c.bf16 %v214, %v213
    %v236 = vpack.c.bf16 %v216, %v215
    %v237 = vpack.c.bf16 %v218, %v217
    %v238 = vpack.c.bf16 %v220, %v219
    %v239 = vpack.c.bf16 %v222, %v221
    %v240 = vpack.c.bf16 %v224, %v223
    %v241 = vld [vmem:[%s1] sm:$0xf]
    %v242 = vld [vmem:[%s1 + $0x4] sm:$0xf]
    %v243 = vld [vmem:[%s1 + $0x8] sm:$0xf]
    %v244 = vld [vmem:[%s1 + $0xc] sm:$0xf]
    %v245 = vld [vmem:[%s1 + $0x10] sm:$0xf]
    %v246 = vld [vmem:[%s1 + $0x14] sm:$0xf]
    %v247 = vld [vmem:[%s1 + $0x18] sm:$0xf]
    %v248 = vld [vmem:[%s1 + $0x1c] sm:$0xf]
    %v249 = vld [vmem:[%s1 + $0x20] sm:$0xf]
    %v250 = vld [vmem:[%s1 + $0x24] sm:$0xf]
    %v251 = vld [vmem:[%s1 + $0x28] sm:$0xf]
    %v252 = vld [vmem:[%s1 + $0x2c] sm:$0xf]
    %v253 = vld [vmem:[%s1 + $0x30] sm:$0xf]
    %v254 = vld [vmem:[%s1 + $0x34] sm:$0xf]
    %v255 = vld [vmem:[%s1 + $0x38] sm:$0xf]
    %v256 = vld [vmem:[%s1 + $0x3c] sm:$0xf]
    %v273 = vunpack.c.l.b16 %v241
    %v274 = vunpack.c.l.b16 %v242
    %v275 = vunpack.c.l.b16 %v243
    %v276 = vunpack.c.l.b16 %v244
    %v277 = vunpack.c.l.b16 %v245
    %v278 = vunpack.c.l.b16 %v246
    %v279 = vunpack.c.l.b16 %v247
    %v280 = vunpack.c.l.b16 %v248
    %v281 = vunpack.c.l.b16 %v249
    %v282 = vunpack.c.l.b16 %v250
    %v283 = vunpack.c.l.b16 %v251
    %v284 = vunpack.c.l.b16 %v252
    %v285 = vunpack.c.l.b16 %v253
    %v286 = vunpack.c.l.b16 %v254
    %v287 = vunpack.c.l.b16 %v255
    %v288 = vunpack.c.l.b16 %v256
    %v289 = vpack.c.b16 %v274, %v273
    %v290 = vpack.c.b16 %v276, %v275
    %v291 = vpack.c.b16 %v278, %v277
    %v292 = vpack.c.b16 %v280, %v279
    %v293 = vpack.c.b16 %v282, %v281
    %v294 = vpack.c.b16 %v284, %v283
    %v295 = vpack.c.b16 %v286, %v285
    %v296 = vpack.c.b16 %v288, %v287
    %305 = vmatprep.subr.bf16.mxu0 0
    %306 = vmatpush1.bf16.msra.mxu0 %v296
    %307 = vmatprep.subr.bf16.mxu0 0
    %308 = vmatpush1.bf16.msra.mxu0 %v295
    %309 = vmatprep.subr.bf16.mxu0 0
    %310 = vmatpush1.bf16.msra.mxu0 %v294
    %311 = vmatprep.subr.bf16.mxu0 0
    %312 = vmatpush1.bf16.msra.mxu0 %v293
    %313 = vmatprep.subr.bf16.mxu0 0
    %314 = vmatpush1.bf16.msra.mxu0 %v292
    %315 = vmatprep.subr.bf16.mxu0 0
    %316 = vmatpush1.bf16.msra.mxu0 %v291
    %317 = vmatprep.subr.bf16.mxu0 0
    %318 = vmatpush1.bf16.msra.mxu0 %v290
    %319 = vmatprep.subr.bf16.mxu0 0
    %320 = vmatpush1.bf16.msra.mxu0 %v289
    %321 = vmatprep.subr.bf16.mxu0 0
    %322 = vmatpush2.bf16.msra.mxu0 0
    %323 = vmatprep.subr.bf16.mxu0 0
    %324 = vmatpush2.bf16.msra.mxu0 0
    %325 = vmatprep.subr.bf16.mxu0 0
    %326 = vmatpush2.bf16.msra.mxu0 0
    %327 = vmatprep.subr.bf16.mxu0 0
    %328 = vmatpush2.bf16.msra.mxu0 0
    %329 = vmatprep.subr.bf16.mxu0 0
    %330 = vmatpush2.bf16.msra.mxu0 0
    %331 = vmatprep.subr.bf16.mxu0 0
    %332 = vmatpush2.bf16.msra.mxu0 0
    %333 = vmatprep.subr.bf16.mxu0 0
    %334 = vmatpush2.bf16.msra.mxu0 0
    %335 = vmatprep.subr.bf16.mxu0 0
    %336 = vmatpush2.bf16.msra.mxu0 0
    %337 = vmatprep.mubr.bf16.mxu0 0
    %338 = vmatmul.mubr.bf16.gmra.mxu0 %v225
    %v339 = vpop.f32.mrf.mxu0
    %v340 = vadd.f32 0.0, %v339
    %v341 = vpop.f32.mrf.mxu0
    %v342 = vpop.f32.mrf.mxu0
    %v343 = vadd.f32 0.0, %v342
    %v344 = vpop.f32.mrf.mxu0
    %345 = vmatprep.mubr.bf16.mxu0 0
    %346 = vmatmul.mubr.bf16.gmra.mxu0 %v226
    %v347 = vpop.f32.mrf.mxu0
    %v348 = vadd.f32 0.0, %v347
    %v349 = vpop.f32.mrf.mxu0
    %v350 = vpop.f32.mrf.mxu0
    %v351 = vadd.f32 0.0, %v350
    %v352 = vpop.f32.mrf.mxu0
    %353 = vmatprep.mubr.bf16.mxu0 0
    %354 = vmatmul.mubr.bf16.gmra.mxu0 %v227
    %v355 = vpop.f32.mrf.mxu0
    %v356 = vadd.f32 0.0, %v355
    %v357 = vpop.f32.mrf.mxu0
    %v358 = vpop.f32.mrf.mxu0
    %v359 = vadd.f32 0.0, %v358
    %v360 = vpop.f32.mrf.mxu0
    %361 = vmatprep.mubr.bf16.mxu0 0
    %362 = vmatmul.mubr.bf16.gmra.mxu0 %v228
    %v363 = vpop.f32.mrf.mxu0
    %v364 = vadd.f32 0.0, %v363
    %v365 = vpop.f32.mrf.mxu0
    %v366 = vpop.f32.mrf.mxu0
    %v367 = vadd.f32 0.0, %v366
    %v368 = vpop.f32.mrf.mxu0
    %369 = vmatprep.mubr.bf16.mxu0 0
    %370 = vmatmul.mubr.bf16.gmra.mxu0 %v229
    %v371 = vpop.f32.mrf.mxu0
    %v372 = vadd.f32 0.0, %v371
    %v373 = vpop.f32.mrf.mxu0
    %v374 = vpop.f32.mrf.mxu0
    %v375 = vadd.f32 0.0, %v374
    %v376 = vpop.f32.mrf.mxu0
    %377 = vmatprep.mubr.bf16.mxu0 0
    %378 = vmatmul.mubr.bf16.gmra.mxu0 %v230
    %v379 = vpop.f32.mrf.mxu0
    %v380 = vadd.f32 0.0, %v379
    %v381 = vpop.f32.mrf.mxu0
    %v382 = vpop.f32.mrf.mxu0
    %v383 = vadd.f32 0.0, %v382
    %v384 = vpop.f32.mrf.mxu0
    %385 = vmatprep.mubr.bf16.mxu0 0
    %386 = vmatmul.mubr.bf16.gmra.mxu0 %v231
    %v387 = vpop.f32.mrf.mxu0
    %v388 = vadd.f32 0.0, %v387
    %v389 = vpop.f32.mrf.mxu0
    %v390 = vpop.f32.mrf.mxu0
    %v391 = vadd.f32 0.0, %v390
    %v392 = vpop.f32.mrf.mxu0
    %393 = vmatprep.mubr.bf16.mxu0 0
    %394 = vmatmul.mubr.bf16.gmra.mxu0 %v232
    %v395 = vpop.f32.mrf.mxu0
    %v396 = vadd.f32 0.0, %v395
    %v397 = vpop.f32.mrf.mxu0
    %v398 = vpop.f32.mrf.mxu0
    %v399 = vadd.f32 0.0, %v398
    %v400 = vpop.f32.mrf.mxu0
    %401 = vmatprep.mubr.bf16.mxu0 0
    %402 = vmatmul.mubr.bf16.gmra.mxu0 %v233
    %v403 = vpop.f32.mrf.mxu0
    %v404 = vadd.f32 0.0, %v403
    %v405 = vpop.f32.mrf.mxu0
    %v406 = vpop.f32.mrf.mxu0
    %v407 = vadd.f32 0.0, %v406
    %v408 = vpop.f32.mrf.mxu0
    %409 = vmatprep.mubr.bf16.mxu0 0
    %410 = vmatmul.mubr.bf16.gmra.mxu0 %v234
    %v411 = vpop.f32.mrf.mxu0
    %v412 = vadd.f32 0.0, %v411
    %v413 = vpop.f32.mrf.mxu0
    %v414 = vpop.f32.mrf.mxu0
    %v415 = vadd.f32 0.0, %v414
    %v416 = vpop.f32.mrf.mxu0
    %417 = vmatprep.mubr.bf16.mxu0 0
    %418 = vmatmul.mubr.bf16.gmra.mxu0 %v235
    %v419 = vpop.f32.mrf.mxu0
    %v420 = vadd.f32 0.0, %v419
    %v421 = vpop.f32.mrf.mxu0
    %v422 = vpop.f32.mrf.mxu0
    %v423 = vadd.f32 0.0, %v422
    %v424 = vpop.f32.mrf.mxu0
    %425 = vmatprep.mubr.bf16.mxu0 0
    %426 = vmatmul.mubr.bf16.gmra.mxu0 %v236
    %v427 = vpop.f32.mrf.mxu0
    %v428 = vadd.f32 0.0, %v427
    %v429 = vpop.f32.mrf.mxu0
    %v430 = vpop.f32.mrf.mxu0
    %v431 = vadd.f32 0.0, %v430
    %v432 = vpop.f32.mrf.mxu0
    %433 = vmatprep.mubr.bf16.mxu0 0
    %434 = vmatmul.mubr.bf16.gmra.mxu0 %v237
    %v435 = vpop.f32.mrf.mxu0
    %v436 = vadd.f32 0.0, %v435
    %v437 = vpop.f32.mrf.mxu0
    %v438 = vpop.f32.mrf.mxu0
    %v439 = vadd.f32 0.0, %v438
    %v440 = vpop.f32.mrf.mxu0
    %441 = vmatprep.mubr.bf16.mxu0 0
    %442 = vmatmul.mubr.bf16.gmra.mxu0 %v238
    %v443 = vpop.f32.mrf.mxu0
    %v444 = vadd.f32 0.0, %v443
    %v445 = vpop.f32.mrf.mxu0
    %v446 = vpop.f32.mrf.mxu0
    %v447 = vadd.f32 0.0, %v446
    %v448 = vpop.f32.mrf.mxu0
    %449 = vmatprep.mubr.bf16.mxu0 0
    %450 = vmatmul.mubr.bf16.gmra.mxu0 %v239
    %v451 = vpop.f32.mrf.mxu0
    %v452 = vadd.f32 0.0, %v451
    %v453 = vpop.f32.mrf.mxu0
    %v454 = vpop.f32.mrf.mxu0
    %v455 = vadd.f32 0.0, %v454
    %v456 = vpop.f32.mrf.mxu0
    %457 = vmatprep.mubr.bf16.mxu0 0
    %458 = vmatmul.mubr.bf16.gmra.mxu0 %v240
    %v459 = vpop.f32.mrf.mxu0
    %v460 = vadd.f32 0.0, %v459
    %v461 = vpop.f32.mrf.mxu0
    %v462 = vpop.f32.mrf.mxu0
    %v463 = vadd.f32 0.0, %v462
    %v464 = vpop.f32.mrf.mxu0
    %465 = vdwg.mxu0
    %v466 = vpack.c.bf16 %v343, %v340
    %v467 = vpack.c.bf16 %v351, %v348
    %v468 = vpack.c.bf16 %v359, %v356
    %v469 = vpack.c.bf16 %v367, %v364
    %v470 = vpack.c.bf16 %v375, %v372
    %v471 = vpack.c.bf16 %v383, %v380
    %v472 = vpack.c.bf16 %v391, %v388
    %v473 = vpack.c.bf16 %v399, %v396
    %v474 = vpack.c.bf16 %v407, %v404
    %v475 = vpack.c.bf16 %v415, %v412
    %v476 = vpack.c.bf16 %v423, %v420
    %v477 = vpack.c.bf16 %v431, %v428
    %v478 = vpack.c.bf16 %v439, %v436
    %v479 = vpack.c.bf16 %v447, %v444
    %v480 = vpack.c.bf16 %v455, %v452
    %v481 = vpack.c.bf16 %v463, %v460
    %v482 = vld [vmem:[%s2] sm:$0xf]
    %v483 = vld [vmem:[%s2 + $0x4] sm:$0xf]
    %v484 = vld [vmem:[%s2 + $0x8] sm:$0xf]
    %v485 = vld [vmem:[%s2 + $0xc] sm:$0xf]
    %v486 = vld [vmem:[%s2 + $0x10] sm:$0xf]
    %v487 = vld [vmem:[%s2 + $0x14] sm:$0xf]
    %v488 = vld [vmem:[%s2 + $0x18] sm:$0xf]
    %v489 = vld [vmem:[%s2 + $0x1c] sm:$0xf]
    %v490 = vld [vmem:[%s2 + $0x20] sm:$0xf]
    %v491 = vld [vmem:[%s2 + $0x24] sm:$0xf]
    %v492 = vld [vmem:[%s2 + $0x28] sm:$0xf]
    %v493 = vld [vmem:[%s2 + $0x2c] sm:$0xf]
    %v494 = vld [vmem:[%s2 + $0x30] sm:$0xf]
    %v495 = vld [vmem:[%s2 + $0x34] sm:$0xf]
    %v496 = vld [vmem:[%s2 + $0x38] sm:$0xf]
    %v497 = vld [vmem:[%s2 + $0x3c] sm:$0xf]
    %v498 = vld [vmem:[%s3] sm:$0x1]
    %v500 = vlaneseq
    %v501 = vshrl.u32 %v500, 7
    %v502 = vsub.s32 0, %v501
    %v503 = vrot.slane %v498, %v502
    %v521 = vunpack.c.l.b16 %v482
    %v522 = vunpack.c.l.b16 %v483
    %v523 = vunpack.c.l.b16 %v484
    %v524 = vunpack.c.l.b16 %v485
    %v525 = vunpack.c.l.b16 %v486
    %v526 = vunpack.c.l.b16 %v487
    %v527 = vunpack.c.l.b16 %v488
    %v528 = vunpack.c.l.b16 %v489
    %v529 = vunpack.c.l.b16 %v490
    %v530 = vunpack.c.l.b16 %v491
    %v531 = vunpack.c.l.b16 %v492
    %v532 = vunpack.c.l.b16 %v493
    %v533 = vunpack.c.l.b16 %v494
    %v534 = vunpack.c.l.b16 %v495
    %v535 = vunpack.c.l.b16 %v496
    %v536 = vunpack.c.l.b16 %v497
    %v537 = vpack.c.b16 %v522, %v521
    %v538 = vpack.c.b16 %v524, %v523
    %v539 = vpack.c.b16 %v526, %v525
    %v540 = vpack.c.b16 %v528, %v527
    %v541 = vpack.c.b16 %v530, %v529
    %v542 = vpack.c.b16 %v532, %v531
    %v543 = vpack.c.b16 %v534, %v533
    %v544 = vpack.c.b16 %v536, %v535
    %553 = vmatprep.subr.bf16.mxu0 0
    %554 = vmatpush1.bf16.msra.mxu0 %v544
    %555 = vmatprep.subr.bf16.mxu0 0
    %556 = vmatpush1.bf16.msra.mxu0 %v543
    %557 = vmatprep.subr.bf16.mxu0 0
    %558 = vmatpush1.bf16.msra.mxu0 %v542
    %559 = vmatprep.subr.bf16.mxu0 0
    %560 = vmatpush1.bf16.msra.mxu0 %v541
    %561 = vmatprep.subr.bf16.mxu0 0
    %562 = vmatpush1.bf16.msra.mxu0 %v540
    %563 = vmatprep.subr.bf16.mxu0 0
    %564 = vmatpush1.bf16.msra.mxu0 %v539
    %565 = vmatprep.subr.bf16.mxu0 0
    %566 = vmatpush1.bf16.msra.mxu0 %v538
    %567 = vmatprep.subr.bf16.mxu0 0
    %568 = vmatpush1.bf16.msra.mxu0 %v537
    %569 = vmatprep.subr.bf16.mxu0 0
    %570 = vmatpush2.bf16.msra.mxu0 0
    %571 = vmatprep.subr.bf16.mxu0 0
    %572 = vmatpush2.bf16.msra.mxu0 0
    %573 = vmatprep.subr.bf16.mxu0 0
    %574 = vmatpush2.bf16.msra.mxu0 0
    %575 = vmatprep.subr.bf16.mxu0 0
    %576 = vmatpush2.bf16.msra.mxu0 0
    %577 = vmatprep.subr.bf16.mxu0 0
    %578 = vmatpush2.bf16.msra.mxu0 0
    %579 = vmatprep.subr.bf16.mxu0 0
    %580 = vmatpush2.bf16.msra.mxu0 0
    %581 = vmatprep.subr.bf16.mxu0 0
    %582 = vmatpush2.bf16.msra.mxu0 0
    %583 = vmatprep.subr.bf16.mxu0 0
    %584 = vmatpush2.bf16.msra.mxu0 0
    %585 = vmatprep.mubr.bf16.mxu0 0
    %586 = vmatmul.mubr.bf16.gmra.mxu0 %v466
    %v587 = vpop.f32.mrf.mxu0
    %v588 = vadd.f32 %v503, %v587
    %v589 = vpop.f32.mrf.mxu0
    %v590 = vpop.f32.mrf.mxu0
    %v591 = vadd.f32 %v503, %v590
    %v592 = vpop.f32.mrf.mxu0
    %593 = vmatprep.mubr.bf16.mxu0 0
    %594 = vmatmul.mubr.bf16.gmra.mxu0 %v467
    %v595 = vpop.f32.mrf.mxu0
    %v596 = vadd.f32 %v503, %v595
    %v597 = vpop.f32.mrf.mxu0
    %v598 = vpop.f32.mrf.mxu0
    %v599 = vadd.f32 %v503, %v598
    %v600 = vpop.f32.mrf.mxu0
    %601 = vmatprep.mubr.bf16.mxu0 0
    %602 = vmatmul.mubr.bf16.gmra.mxu0 %v468
    %v603 = vpop.f32.mrf.mxu0
    %v604 = vadd.f32 %v503, %v603
    %v605 = vpop.f32.mrf.mxu0
    %v606 = vpop.f32.mrf.mxu0
    %v607 = vadd.f32 %v503, %v606
    %v608 = vpop.f32.mrf.mxu0
    %609 = vmatprep.mubr.bf16.mxu0 0
    %610 = vmatmul.mubr.bf16.gmra.mxu0 %v469
    %v611 = vpop.f32.mrf.mxu0
    %v612 = vadd.f32 %v503, %v611
    %v613 = vpop.f32.mrf.mxu0
    %v614 = vpop.f32.mrf.mxu0
    %v615 = vadd.f32 %v503, %v614
    %v616 = vpop.f32.mrf.mxu0
    %617 = vmatprep.mubr.bf16.mxu0 0
    %618 = vmatmul.mubr.bf16.gmra.mxu0 %v470
    %v619 = vpop.f32.mrf.mxu0
    %v620 = vadd.f32 %v503, %v619
    %v621 = vpop.f32.mrf.mxu0
    %v622 = vpop.f32.mrf.mxu0
    %v623 = vadd.f32 %v503, %v622
    %v624 = vpop.f32.mrf.mxu0
    %625 = vmatprep.mubr.bf16.mxu0 0
    %626 = vmatmul.mubr.bf16.gmra.mxu0 %v471
    %v627 = vpop.f32.mrf.mxu0
    %v628 = vadd.f32 %v503, %v627
    %v629 = vpop.f32.mrf.mxu0
    %v630 = vpop.f32.mrf.mxu0
    %v631 = vadd.f32 %v503, %v630
    %v632 = vpop.f32.mrf.mxu0
    %633 = vmatprep.mubr.bf16.mxu0 0
    %634 = vmatmul.mubr.bf16.gmra.mxu0 %v472
    %v635 = vpop.f32.mrf.mxu0
    %v636 = vadd.f32 %v503, %v635
    %v637 = vpop.f32.mrf.mxu0
    %v638 = vpop.f32.mrf.mxu0
    %v639 = vadd.f32 %v503, %v638
    %v640 = vpop.f32.mrf.mxu0
    %641 = vmatprep.mubr.bf16.mxu0 0
    %642 = vmatmul.mubr.bf16.gmra.mxu0 %v473
    %v643 = vpop.f32.mrf.mxu0
    %v644 = vadd.f32 %v503, %v643
    %v645 = vpop.f32.mrf.mxu0
    %v646 = vpop.f32.mrf.mxu0
    %v647 = vadd.f32 %v503, %v646
    %v648 = vpop.f32.mrf.mxu0
    %649 = vmatprep.mubr.bf16.mxu0 0
    %650 = vmatmul.mubr.bf16.gmra.mxu0 %v474
    %v651 = vpop.f32.mrf.mxu0
    %v652 = vadd.f32 %v503, %v651
    %v653 = vpop.f32.mrf.mxu0
    %v654 = vpop.f32.mrf.mxu0
    %v655 = vadd.f32 %v503, %v654
    %v656 = vpop.f32.mrf.mxu0
    %657 = vmatprep.mubr.bf16.mxu0 0
    %658 = vmatmul.mubr.bf16.gmra.mxu0 %v475
    %v659 = vpop.f32.mrf.mxu0
    %v660 = vadd.f32 %v503, %v659
    %v661 = vpop.f32.mrf.mxu0
    %v662 = vpop.f32.mrf.mxu0
    %v663 = vadd.f32 %v503, %v662
    %v664 = vpop.f32.mrf.mxu0
    %665 = vmatprep.mubr.bf16.mxu0 0
    %666 = vmatmul.mubr.bf16.gmra.mxu0 %v476
    %v667 = vpop.f32.mrf.mxu0
    %v668 = vadd.f32 %v503, %v667
    %v669 = vpop.f32.mrf.mxu0
    %v670 = vpop.f32.mrf.mxu0
    %v671 = vadd.f32 %v503, %v670
    %v672 = vpop.f32.mrf.mxu0
    %673 = vmatprep.mubr.bf16.mxu0 0
    %674 = vmatmul.mubr.bf16.gmra.mxu0 %v477
    %v675 = vpop.f32.mrf.mxu0
    %v676 = vadd.f32 %v503, %v675
    %v677 = vpop.f32.mrf.mxu0
    %v678 = vpop.f32.mrf.mxu0
    %v679 = vadd.f32 %v503, %v678
    %v680 = vpop.f32.mrf.mxu0
    %681 = vmatprep.mubr.bf16.mxu0 0
    %682 = vmatmul.mubr.bf16.gmra.mxu0 %v478
    %v683 = vpop.f32.mrf.mxu0
    %v684 = vadd.f32 %v503, %v683
    %v685 = vpop.f32.mrf.mxu0
    %v686 = vpop.f32.mrf.mxu0
    %v687 = vadd.f32 %v503, %v686
    %v688 = vpop.f32.mrf.mxu0
    %689 = vmatprep.mubr.bf16.mxu0 0
    %690 = vmatmul.mubr.bf16.gmra.mxu0 %v479
    %v691 = vpop.f32.mrf.mxu0
    %v692 = vadd.f32 %v503, %v691
    %v693 = vpop.f32.mrf.mxu0
    %v694 = vpop.f32.mrf.mxu0
    %v695 = vadd.f32 %v503, %v694
    %v696 = vpop.f32.mrf.mxu0
    %697 = vmatprep.mubr.bf16.mxu0 0
    %698 = vmatmul.mubr.bf16.gmra.mxu0 %v480
    %v699 = vpop.f32.mrf.mxu0
    %v700 = vadd.f32 %v503, %v699
    %v701 = vpop.f32.mrf.mxu0
    %v702 = vpop.f32.mrf.mxu0
    %v703 = vadd.f32 %v503, %v702
    %v704 = vpop.f32.mrf.mxu0
    %705 = vmatprep.mubr.bf16.mxu0 0
    %706 = vmatmul.mubr.bf16.gmra.mxu0 %v481
    %v707 = vpop.f32.mrf.mxu0
    %v708 = vadd.f32 %v503, %v707
    %v709 = vpop.f32.mrf.mxu0
    %v710 = vpop.f32.mrf.mxu0
    %v711 = vadd.f32 %v503, %v710
    %v712 = vpop.f32.mrf.mxu0
    %713 = vdwg.mxu0
    %v714 = vmul.f32 %v588, 0.5
    %v715 = vmul.f32 %v591, 0.5
    %v716 = vmul.f32 %v596, 0.5
    %v717 = vmul.f32 %v599, 0.5
    %v718 = vmul.f32 %v604, 0.5
    %v719 = vmul.f32 %v607, 0.5
    %v720 = vmul.f32 %v612, 0.5
    %v721 = vmul.f32 %v615, 0.5
    %v722 = vmul.f32 %v620, 0.5
    %v723 = vmul.f32 %v623, 0.5
    %v724 = vmul.f32 %v628, 0.5
    %v725 = vmul.f32 %v631, 0.5
    %v726 = vmul.f32 %v636, 0.5
    %v727 = vmul.f32 %v639, 0.5
    %v728 = vmul.f32 %v644, 0.5
    %v729 = vmul.f32 %v647, 0.5
    %v730 = vmul.f32 %v652, 0.5
    %v731 = vmul.f32 %v655, 0.5
    %v732 = vmul.f32 %v660, 0.5
    %v733 = vmul.f32 %v663, 0.5
    %v734 = vmul.f32 %v668, 0.5
    %v735 = vmul.f32 %v671, 0.5
    %v736 = vmul.f32 %v676, 0.5
    %v737 = vmul.f32 %v679, 0.5
    %v738 = vmul.f32 %v684, 0.5
    %v739 = vmul.f32 %v687, 0.5
    %v740 = vmul.f32 %v692, 0.5
    %v741 = vmul.f32 %v695, 0.5
    %v742 = vmul.f32 %v700, 0.5
    %v743 = vmul.f32 %v703, 0.5
    %v744 = vmul.f32 %v708, 0.5
    %v745 = vmul.f32 %v711, 0.5
    %v746 = vmul.f32 %v588, 0.70710677
    %v747 = vmul.f32 %v591, 0.70710677
    %v748 = vmul.f32 %v596, 0.70710677
    %v749 = vmul.f32 %v599, 0.70710677
    %v750 = vmul.f32 %v604, 0.70710677
    %v751 = vmul.f32 %v607, 0.70710677
    %v752 = vmul.f32 %v612, 0.70710677
    %v753 = vmul.f32 %v615, 0.70710677
    %v754 = vmul.f32 %v620, 0.70710677
    %v755 = vmul.f32 %v623, 0.70710677
    %v756 = vmul.f32 %v628, 0.70710677
    %v757 = vmul.f32 %v631, 0.70710677
    %v758 = vmul.f32 %v636, 0.70710677
    %v759 = vmul.f32 %v639, 0.70710677
    %v760 = vmul.f32 %v644, 0.70710677
    %v761 = vmul.f32 %v647, 0.70710677
    %v762 = vmul.f32 %v652, 0.70710677
    %v763 = vmul.f32 %v655, 0.70710677
    %v764 = vmul.f32 %v660, 0.70710677
    %v765 = vmul.f32 %v663, 0.70710677
    %v766 = vmul.f32 %v668, 0.70710677
    %v767 = vmul.f32 %v671, 0.70710677
    %v768 = vmul.f32 %v676, 0.70710677
    %v769 = vmul.f32 %v679, 0.70710677
    %v770 = vmul.f32 %v684, 0.70710677
    %v771 = vmul.f32 %v687, 0.70710677
    %v772 = vmul.f32 %v692, 0.70710677
    %v773 = vmul.f32 %v695, 0.70710677
    %v774 = vmul.f32 %v700, 0.70710677
    %v775 = vmul.f32 %v703, 0.70710677
    %v776 = vmul.f32 %v708, 0.70710677
    %v777 = vmul.f32 %v711, 0.70710677
    %v778 = verf.f32.pop %v746
    %v779 = verf.f32.pop %v747
    %v780 = verf.f32.pop %v748
    %v781 = verf.f32.pop %v749
    %v782 = verf.f32.pop %v750
    %v783 = verf.f32.pop %v751
    %v784 = verf.f32.pop %v752
    %v785 = verf.f32.pop %v753
    %v786 = verf.f32.pop %v754
    %v787 = verf.f32.pop %v755
    %v788 = verf.f32.pop %v756
    %v789 = verf.f32.pop %v757
    %v790 = verf.f32.pop %v758
    %v791 = verf.f32.pop %v759
    %v792 = verf.f32.pop %v760
    %v793 = verf.f32.pop %v761
    %v794 = verf.f32.pop %v762
    %v795 = verf.f32.pop %v763
    %v796 = verf.f32.pop %v764
    %v797 = verf.f32.pop %v765
    %v798 = verf.f32.pop %v766
    %v799 = verf.f32.pop %v767
    %v800 = verf.f32.pop %v768
    %v801 = verf.f32.pop %v769
    %v802 = verf.f32.pop %v770
    %v803 = verf.f32.pop %v771
    %v804 = verf.f32.pop %v772
    %v805 = verf.f32.pop %v773
    %v806 = verf.f32.pop %v774
    %v807 = verf.f32.pop %v775
    %v808 = verf.f32.pop %v776
    %v809 = verf.f32.pop %v777
    %v810 = vadd.f32 %v778, 1.0
    %v811 = vadd.f32 %v779, 1.0
    %v812 = vadd.f32 %v780, 1.0
    %v813 = vadd.f32 %v781, 1.0
    %v814 = vadd.f32 %v782, 1.0
    %v815 = vadd.f32 %v783, 1.0
    %v816 = vadd.f32 %v784, 1.0
    %v817 = vadd.f32 %v785, 1.0
    %v818 = vadd.f32 %v786, 1.0
    %v819 = vadd.f32 %v787, 1.0
    %v820 = vadd.f32 %v788, 1.0
    %v821 = vadd.f32 %v789, 1.0
    %v822 = vadd.f32 %v790, 1.0
    %v823 = vadd.f32 %v791, 1.0
    %v824 = vadd.f32 %v792, 1.0
    %v825 = vadd.f32 %v793, 1.0
    %v826 = vadd.f32 %v794, 1.0
    %v827 = vadd.f32 %v795, 1.0
    %v828 = vadd.f32 %v796, 1.0
    %v829 = vadd.f32 %v797, 1.0
    %v830 = vadd.f32 %v798, 1.0
    %v831 = vadd.f32 %v799, 1.0
    %v832 = vadd.f32 %v800, 1.0
    %v833 = vadd.f32 %v801, 1.0
    %v834 = vadd.f32 %v802, 1.0
    %v835 = vadd.f32 %v803, 1.0
    %v836 = vadd.f32 %v804, 1.0
    %v837 = vadd.f32 %v805, 1.0
    %v838 = vadd.f32 %v806, 1.0
    %v839 = vadd.f32 %v807, 1.0
    %v840 = vadd.f32 %v808, 1.0
    %v841 = vadd.f32 %v809, 1.0
    %v842 = vmul.f32 %v714, %v810
    %v843 = vmul.f32 %v715, %v811
    %v844 = vmul.f32 %v716, %v812
    %v845 = vmul.f32 %v717, %v813
    %v846 = vmul.f32 %v718, %v814
    %v847 = vmul.f32 %v719, %v815
    %v848 = vmul.f32 %v720, %v816
    %v849 = vmul.f32 %v721, %v817
    %v850 = vmul.f32 %v722, %v818
    %v851 = vmul.f32 %v723, %v819
    %v852 = vmul.f32 %v724, %v820
    %v853 = vmul.f32 %v725, %v821
    %v854 = vmul.f32 %v726, %v822
    %v855 = vmul.f32 %v727, %v823
    %v856 = vmul.f32 %v728, %v824
    %v857 = vmul.f32 %v729, %v825
    %v858 = vmul.f32 %v730, %v826
    %v859 = vmul.f32 %v731, %v827
    %v860 = vmul.f32 %v732, %v828
    %v861 = vmul.f32 %v733, %v829
    %v862 = vmul.f32 %v734, %v830
    %v863 = vmul.f32 %v735, %v831
    %v864 = vmul.f32 %v736, %v832
    %v865 = vmul.f32 %v737, %v833
    %v866 = vmul.f32 %v738, %v834
    %v867 = vmul.f32 %v739, %v835
    %v868 = vmul.f32 %v740, %v836
    %v869 = vmul.f32 %v741, %v837
    %v870 = vmul.f32 %v742, %v838
    %v871 = vmul.f32 %v743, %v839
    %v872 = vmul.f32 %v744, %v840
    %v873 = vmul.f32 %v745, %v841
    %v874 = vpack.c.bf16 %v843, %v842
    %v875 = vpack.c.bf16 %v845, %v844
    %v876 = vpack.c.bf16 %v847, %v846
    %v877 = vpack.c.bf16 %v849, %v848
    %v878 = vpack.c.bf16 %v851, %v850
    %v879 = vpack.c.bf16 %v853, %v852
    %v880 = vpack.c.bf16 %v855, %v854
    %v881 = vpack.c.bf16 %v857, %v856
    %v882 = vpack.c.bf16 %v859, %v858
    %v883 = vpack.c.bf16 %v861, %v860
    %v884 = vpack.c.bf16 %v863, %v862
    %v885 = vpack.c.bf16 %v865, %v864
    %v886 = vpack.c.bf16 %v867, %v866
    %v887 = vpack.c.bf16 %v869, %v868
    %v888 = vpack.c.bf16 %v871, %v870
    %v889 = vpack.c.bf16 %v873, %v872
    %v890 = vld [vmem:[%s4] sm:$0xf]
    %v891 = vld [vmem:[%s4 + $0x4] sm:$0xf]
    %v892 = vld [vmem:[%s4 + $0x8] sm:$0xf]
    %v893 = vld [vmem:[%s4 + $0xc] sm:$0xf]
    %v894 = vld [vmem:[%s4 + $0x10] sm:$0xf]
    %v895 = vld [vmem:[%s4 + $0x14] sm:$0xf]
    %v896 = vld [vmem:[%s4 + $0x18] sm:$0xf]
    %v897 = vld [vmem:[%s4 + $0x1c] sm:$0xf]
    %v898 = vld [vmem:[%s4 + $0x20] sm:$0xf]
    %v899 = vld [vmem:[%s4 + $0x24] sm:$0xf]
    %v900 = vld [vmem:[%s4 + $0x28] sm:$0xf]
    %v901 = vld [vmem:[%s4 + $0x2c] sm:$0xf]
    %v902 = vld [vmem:[%s4 + $0x30] sm:$0xf]
    %v903 = vld [vmem:[%s4 + $0x34] sm:$0xf]
    %v904 = vld [vmem:[%s4 + $0x38] sm:$0xf]
    %v905 = vld [vmem:[%s4 + $0x3c] sm:$0xf]
    %v906 = vld [vmem:[%s5] sm:$0x1]
    %v908 = vlaneseq
    %v909 = vshrl.u32 %v908, 7
    %v910 = vsub.s32 0, %v909
    %v911 = vrot.slane %v906, %v910
    %v929 = vunpack.c.l.b16 %v890
    %v930 = vunpack.c.l.b16 %v891
    %v931 = vunpack.c.l.b16 %v892
    %v932 = vunpack.c.l.b16 %v893
    %v933 = vunpack.c.l.b16 %v894
    %v934 = vunpack.c.l.b16 %v895
    %v935 = vunpack.c.l.b16 %v896
    %v936 = vunpack.c.l.b16 %v897
    %v937 = vunpack.c.l.b16 %v898
    %v938 = vunpack.c.l.b16 %v899
    %v939 = vunpack.c.l.b16 %v900
    %v940 = vunpack.c.l.b16 %v901
    %v941 = vunpack.c.l.b16 %v902
    %v942 = vunpack.c.l.b16 %v903
    %v943 = vunpack.c.l.b16 %v904
    %v944 = vunpack.c.l.b16 %v905
    %v945 = vpack.c.b16 %v930, %v929
    %v946 = vpack.c.b16 %v932, %v931
    %v947 = vpack.c.b16 %v934, %v933
    %v948 = vpack.c.b16 %v936, %v935
    %v949 = vpack.c.b16 %v938, %v937
    %v950 = vpack.c.b16 %v940, %v939
    %v951 = vpack.c.b16 %v942, %v941
    %v952 = vpack.c.b16 %v944, %v943
    %961 = vmatprep.subr.bf16.mxu0 0
    %962 = vmatpush1.bf16.msra.mxu0 %v952
    %963 = vmatprep.subr.bf16.mxu0 0
    %964 = vmatpush1.bf16.msra.mxu0 %v951
    %965 = vmatprep.subr.bf16.mxu0 0
    %966 = vmatpush1.bf16.msra.mxu0 %v950
    %967 = vmatprep.subr.bf16.mxu0 0
    %968 = vmatpush1.bf16.msra.mxu0 %v949
    %969 = vmatprep.subr.bf16.mxu0 0
    %970 = vmatpush1.bf16.msra.mxu0 %v948
    %971 = vmatprep.subr.bf16.mxu0 0
    %972 = vmatpush1.bf16.msra.mxu0 %v947
    %973 = vmatprep.subr.bf16.mxu0 0
    %974 = vmatpush1.bf16.msra.mxu0 %v946
    %975 = vmatprep.subr.bf16.mxu0 0
    %976 = vmatpush1.bf16.msra.mxu0 %v945
    %977 = vmatprep.subr.bf16.mxu0 0
    %978 = vmatpush2.bf16.msra.mxu0 0
    %979 = vmatprep.subr.bf16.mxu0 0
    %980 = vmatpush2.bf16.msra.mxu0 0
    %981 = vmatprep.subr.bf16.mxu0 0
    %982 = vmatpush2.bf16.msra.mxu0 0
    %983 = vmatprep.subr.bf16.mxu0 0
    %984 = vmatpush2.bf16.msra.mxu0 0
    %985 = vmatprep.subr.bf16.mxu0 0
    %986 = vmatpush2.bf16.msra.mxu0 0
    %987 = vmatprep.subr.bf16.mxu0 0
    %988 = vmatpush2.bf16.msra.mxu0 0
    %989 = vmatprep.subr.bf16.mxu0 0
    %990 = vmatpush2.bf16.msra.mxu0 0
    %991 = vmatprep.subr.bf16.mxu0 0
    %992 = vmatpush2.bf16.msra.mxu0 0
    %993 = vmatprep.mubr.bf16.mxu0 0
    %994 = vmatmul.mubr.bf16.gmra.mxu0 %v874
    %v995 = vpop.f32.mrf.mxu0
    %v996 = vadd.f32 %v911, %v995
    %v997 = vpop.f32.mrf.mxu0
    %v998 = vpop.f32.mrf.mxu0
    %v999 = vadd.f32 %v911, %v998
    %v1000 = vpop.f32.mrf.mxu0
    %1001 = vmatprep.mubr.bf16.mxu0 0
    %1002 = vmatmul.mubr.bf16.gmra.mxu0 %v875
    %v1003 = vpop.f32.mrf.mxu0
    %v1004 = vadd.f32 %v911, %v1003
    %v1005 = vpop.f32.mrf.mxu0
    %v1006 = vpop.f32.mrf.mxu0
    %v1007 = vadd.f32 %v911, %v1006
    %v1008 = vpop.f32.mrf.mxu0
    %1009 = vmatprep.mubr.bf16.mxu0 0
    %1010 = vmatmul.mubr.bf16.gmra.mxu0 %v876
    %v1011 = vpop.f32.mrf.mxu0
    %v1012 = vadd.f32 %v911, %v1011
    %v1013 = vpop.f32.mrf.mxu0
    %v1014 = vpop.f32.mrf.mxu0
    %v1015 = vadd.f32 %v911, %v1014
    %v1016 = vpop.f32.mrf.mxu0
    %1017 = vmatprep.mubr.bf16.mxu0 0
    %1018 = vmatmul.mubr.bf16.gmra.mxu0 %v877
    %v1019 = vpop.f32.mrf.mxu0
    %v1020 = vadd.f32 %v911, %v1019
    %v1021 = vpop.f32.mrf.mxu0
    %v1022 = vpop.f32.mrf.mxu0
    %v1023 = vadd.f32 %v911, %v1022
    %v1024 = vpop.f32.mrf.mxu0
    %1025 = vmatprep.mubr.bf16.mxu0 0
    %1026 = vmatmul.mubr.bf16.gmra.mxu0 %v878
    %v1027 = vpop.f32.mrf.mxu0
    %v1028 = vadd.f32 %v911, %v1027
    %v1029 = vpop.f32.mrf.mxu0
    %v1030 = vpop.f32.mrf.mxu0
    %v1031 = vadd.f32 %v911, %v1030
    %v1032 = vpop.f32.mrf.mxu0
    %1033 = vmatprep.mubr.bf16.mxu0 0
    %1034 = vmatmul.mubr.bf16.gmra.mxu0 %v879
    %v1035 = vpop.f32.mrf.mxu0
    %v1036 = vadd.f32 %v911, %v1035
    %v1037 = vpop.f32.mrf.mxu0
    %v1038 = vpop.f32.mrf.mxu0
    %v1039 = vadd.f32 %v911, %v1038
    %v1040 = vpop.f32.mrf.mxu0
    %1041 = vmatprep.mubr.bf16.mxu0 0
    %1042 = vmatmul.mubr.bf16.gmra.mxu0 %v880
    %v1043 = vpop.f32.mrf.mxu0
    %v1044 = vadd.f32 %v911, %v1043
    %v1045 = vpop.f32.mrf.mxu0
    %v1046 = vpop.f32.mrf.mxu0
    %v1047 = vadd.f32 %v911, %v1046
    %v1048 = vpop.f32.mrf.mxu0
    %1049 = vmatprep.mubr.bf16.mxu0 0
    %1050 = vmatmul.mubr.bf16.gmra.mxu0 %v881
    %v1051 = vpop.f32.mrf.mxu0
    %v1052 = vadd.f32 %v911, %v1051
    %v1053 = vpop.f32.mrf.mxu0
    %v1054 = vpop.f32.mrf.mxu0
    %v1055 = vadd.f32 %v911, %v1054
    %v1056 = vpop.f32.mrf.mxu0
    %1057 = vmatprep.mubr.bf16.mxu0 0
    %1058 = vmatmul.mubr.bf16.gmra.mxu0 %v882
    %v1059 = vpop.f32.mrf.mxu0
    %v1060 = vadd.f32 %v911, %v1059
    %v1061 = vpop.f32.mrf.mxu0
    %v1062 = vpop.f32.mrf.mxu0
    %v1063 = vadd.f32 %v911, %v1062
    %v1064 = vpop.f32.mrf.mxu0
    %1065 = vmatprep.mubr.bf16.mxu0 0
    %1066 = vmatmul.mubr.bf16.gmra.mxu0 %v883
    %v1067 = vpop.f32.mrf.mxu0
    %v1068 = vadd.f32 %v911, %v1067
    %v1069 = vpop.f32.mrf.mxu0
    %v1070 = vpop.f32.mrf.mxu0
    %v1071 = vadd.f32 %v911, %v1070
    %v1072 = vpop.f32.mrf.mxu0
    %1073 = vmatprep.mubr.bf16.mxu0 0
    %1074 = vmatmul.mubr.bf16.gmra.mxu0 %v884
    %v1075 = vpop.f32.mrf.mxu0
    %v1076 = vadd.f32 %v911, %v1075
    %v1077 = vpop.f32.mrf.mxu0
    %v1078 = vpop.f32.mrf.mxu0
    %v1079 = vadd.f32 %v911, %v1078
    %v1080 = vpop.f32.mrf.mxu0
    %1081 = vmatprep.mubr.bf16.mxu0 0
    %1082 = vmatmul.mubr.bf16.gmra.mxu0 %v885
    %v1083 = vpop.f32.mrf.mxu0
    %v1084 = vadd.f32 %v911, %v1083
    %v1085 = vpop.f32.mrf.mxu0
    %v1086 = vpop.f32.mrf.mxu0
    %v1087 = vadd.f32 %v911, %v1086
    %v1088 = vpop.f32.mrf.mxu0
    %1089 = vmatprep.mubr.bf16.mxu0 0
    %1090 = vmatmul.mubr.bf16.gmra.mxu0 %v886
    %v1091 = vpop.f32.mrf.mxu0
    %v1092 = vadd.f32 %v911, %v1091
    %v1093 = vpop.f32.mrf.mxu0
    %v1094 = vpop.f32.mrf.mxu0
    %v1095 = vadd.f32 %v911, %v1094
    %v1096 = vpop.f32.mrf.mxu0
    %1097 = vmatprep.mubr.bf16.mxu0 0
    %1098 = vmatmul.mubr.bf16.gmra.mxu0 %v887
    %v1099 = vpop.f32.mrf.mxu0
    %v1100 = vadd.f32 %v911, %v1099
    %v1101 = vpop.f32.mrf.mxu0
    %v1102 = vpop.f32.mrf.mxu0
    %v1103 = vadd.f32 %v911, %v1102
    %v1104 = vpop.f32.mrf.mxu0
    %1105 = vmatprep.mubr.bf16.mxu0 0
    %1106 = vmatmul.mubr.bf16.gmra.mxu0 %v888
    %v1107 = vpop.f32.mrf.mxu0
    %v1108 = vadd.f32 %v911, %v1107
    %v1109 = vpop.f32.mrf.mxu0
    %v1110 = vpop.f32.mrf.mxu0
    %v1111 = vadd.f32 %v911, %v1110
    %v1112 = vpop.f32.mrf.mxu0
    %1113 = vmatprep.mubr.bf16.mxu0 0
    %1114 = vmatmul.mubr.bf16.gmra.mxu0 %v889
    %v1115 = vpop.f32.mrf.mxu0
    %v1116 = vadd.f32 %v911, %v1115
    %v1117 = vpop.f32.mrf.mxu0
    %v1118 = vpop.f32.mrf.mxu0
    %v1119 = vadd.f32 %v911, %v1118
    %v1120 = vpop.f32.mrf.mxu0
    %1121 = vdwg.mxu0
    %1122 = vadd.xlane.f32.xlu0 %v996
    %v1123 = vpop.xlane.xlu0 %1122
    %1124 = vadd.xlane.f32.xlu0 %v999
    %v1125 = vpop.xlane.xlu0 %1124
    %1126 = vadd.xlane.f32.xlu0 %v1004
    %v1127 = vpop.xlane.xlu0 %1126
    %1128 = vadd.xlane.f32.xlu0 %v1007
    %v1129 = vpop.xlane.xlu0 %1128
    %1130 = vadd.xlane.f32.xlu0 %v1012
    %v1131 = vpop.xlane.xlu0 %1130
    %1132 = vadd.xlane.f32.xlu0 %v1015
    %v1133 = vpop.xlane.xlu0 %1132
    %1134 = vadd.xlane.f32.xlu0 %v1020
    %v1135 = vpop.xlane.xlu0 %1134
    %1136 = vadd.xlane.f32.xlu0 %v1023
    %v1137 = vpop.xlane.xlu0 %1136
    %1138 = vadd.xlane.f32.xlu0 %v1028
    %v1139 = vpop.xlane.xlu0 %1138
    %1140 = vadd.xlane.f32.xlu0 %v1031
    %v1141 = vpop.xlane.xlu0 %1140
    %1142 = vadd.xlane.f32.xlu0 %v1036
    %v1143 = vpop.xlane.xlu0 %1142
    %1144 = vadd.xlane.f32.xlu0 %v1039
    %v1145 = vpop.xlane.xlu0 %1144
    %1146 = vadd.xlane.f32.xlu0 %v1044
    %v1147 = vpop.xlane.xlu0 %1146
    %1148 = vadd.xlane.f32.xlu0 %v1047
    %v1149 = vpop.xlane.xlu0 %1148
    %1150 = vadd.xlane.f32.xlu0 %v1052
    %v1151 = vpop.xlane.xlu0 %1150
    %1152 = vadd.xlane.f32.xlu0 %v1055
    %v1153 = vpop.xlane.xlu0 %1152
    %1154 = vadd.xlane.f32.xlu0 %v1060
    %v1155 = vpop.xlane.xlu0 %1154
    %1156 = vadd.xlane.f32.xlu0 %v1063
    %v1157 = vpop.xlane.xlu0 %1156
    %1158 = vadd.xlane.f32.xlu0 %v1068
    %v1159 = vpop.xlane.xlu0 %1158
    %1160 = vadd.xlane.f32.xlu0 %v1071
    %v1161 = vpop.xlane.xlu0 %1160
    %1162 = vadd.xlane.f32.xlu0 %v1076
    %v1163 = vpop.xlane.xlu0 %1162
    %1164 = vadd.xlane.f32.xlu0 %v1079
    %v1165 = vpop.xlane.xlu0 %1164
    %1166 = vadd.xlane.f32.xlu0 %v1084
    %v1167 = vpop.xlane.xlu0 %1166
    %1168 = vadd.xlane.f32.xlu0 %v1087
    %v1169 = vpop.xlane.xlu0 %1168
    %1170 = vadd.xlane.f32.xlu0 %v1092
    %v1171 = vpop.xlane.xlu0 %1170
    %1172 = vadd.xlane.f32.xlu0 %v1095
    %v1173 = vpop.xlane.xlu0 %1172
    %1174 = vadd.xlane.f32.xlu0 %v1100
    %v1175 = vpop.xlane.xlu0 %1174
    %1176 = vadd.xlane.f32.xlu0 %v1103
    %v1177 = vpop.xlane.xlu0 %1176
    %1178 = vadd.xlane.f32.xlu0 %v1108
    %v1179 = vpop.xlane.xlu0 %1178
    %1180 = vadd.xlane.f32.xlu0 %v1111
    %v1181 = vpop.xlane.xlu0 %1180
    %1182 = vadd.xlane.f32.xlu0 %v1116
    %v1183 = vpop.xlane.xlu0 %1182
    %1184 = vadd.xlane.f32.xlu0 %v1119
    %v1185 = vpop.xlane.xlu0 %1184
    %v1186 = vmul.f32 %v996, %v996
    %v1187 = vmul.f32 %v999, %v999
    %v1188 = vmul.f32 %v1004, %v1004
    %v1189 = vmul.f32 %v1007, %v1007
    %v1190 = vmul.f32 %v1012, %v1012
    %v1191 = vmul.f32 %v1015, %v1015
    %v1192 = vmul.f32 %v1020, %v1020
    %v1193 = vmul.f32 %v1023, %v1023
    %v1194 = vmul.f32 %v1028, %v1028
    %v1195 = vmul.f32 %v1031, %v1031
    %v1196 = vmul.f32 %v1036, %v1036
    %v1197 = vmul.f32 %v1039, %v1039
    %v1198 = vmul.f32 %v1044, %v1044
    %v1199 = vmul.f32 %v1047, %v1047
    %v1200 = vmul.f32 %v1052, %v1052
    %v1201 = vmul.f32 %v1055, %v1055
    %v1202 = vmul.f32 %v1060, %v1060
    %v1203 = vmul.f32 %v1063, %v1063
    %v1204 = vmul.f32 %v1068, %v1068
    %v1205 = vmul.f32 %v1071, %v1071
    %v1206 = vmul.f32 %v1076, %v1076
    %v1207 = vmul.f32 %v1079, %v1079
    %v1208 = vmul.f32 %v1084, %v1084
    %v1209 = vmul.f32 %v1087, %v1087
    %v1210 = vmul.f32 %v1092, %v1092
    %v1211 = vmul.f32 %v1095, %v1095
    %v1212 = vmul.f32 %v1100, %v1100
    %v1213 = vmul.f32 %v1103, %v1103
    %v1214 = vmul.f32 %v1108, %v1108
    %v1215 = vmul.f32 %v1111, %v1111
    %v1216 = vmul.f32 %v1116, %v1116
    %v1217 = vmul.f32 %v1119, %v1119
    %1218 = vadd.xlane.f32.xlu0 %v1186
    %v1219 = vpop.xlane.xlu0 %1218
    %1220 = vadd.xlane.f32.xlu0 %v1187
    %v1221 = vpop.xlane.xlu0 %1220
    %1222 = vadd.xlane.f32.xlu0 %v1188
    %v1223 = vpop.xlane.xlu0 %1222
    %1224 = vadd.xlane.f32.xlu0 %v1189
    %v1225 = vpop.xlane.xlu0 %1224
    %1226 = vadd.xlane.f32.xlu0 %v1190
    %v1227 = vpop.xlane.xlu0 %1226
    %1228 = vadd.xlane.f32.xlu0 %v1191
    %v1229 = vpop.xlane.xlu0 %1228
    %1230 = vadd.xlane.f32.xlu0 %v1192
    %v1231 = vpop.xlane.xlu0 %1230
    %1232 = vadd.xlane.f32.xlu0 %v1193
    %v1233 = vpop.xlane.xlu0 %1232
    %1234 = vadd.xlane.f32.xlu0 %v1194
    %v1235 = vpop.xlane.xlu0 %1234
    %1236 = vadd.xlane.f32.xlu0 %v1195
    %v1237 = vpop.xlane.xlu0 %1236
    %1238 = vadd.xlane.f32.xlu0 %v1196
    %v1239 = vpop.xlane.xlu0 %1238
    %1240 = vadd.xlane.f32.xlu0 %v1197
    %v1241 = vpop.xlane.xlu0 %1240
    %1242 = vadd.xlane.f32.xlu0 %v1198
    %v1243 = vpop.xlane.xlu0 %1242
    %1244 = vadd.xlane.f32.xlu0 %v1199
    %v1245 = vpop.xlane.xlu0 %1244
    %1246 = vadd.xlane.f32.xlu0 %v1200
    %v1247 = vpop.xlane.xlu0 %1246
    %1248 = vadd.xlane.f32.xlu0 %v1201
    %v1249 = vpop.xlane.xlu0 %1248
    %1250 = vadd.xlane.f32.xlu0 %v1202
    %v1251 = vpop.xlane.xlu0 %1250
    %1252 = vadd.xlane.f32.xlu0 %v1203
    %v1253 = vpop.xlane.xlu0 %1252
    %1254 = vadd.xlane.f32.xlu0 %v1204
    %v1255 = vpop.xlane.xlu0 %1254
    %1256 = vadd.xlane.f32.xlu0 %v1205
    %v1257 = vpop.xlane.xlu0 %1256
    %1258 = vadd.xlane.f32.xlu0 %v1206
    %v1259 = vpop.xlane.xlu0 %1258
    %1260 = vadd.xlane.f32.xlu0 %v1207
    %v1261 = vpop.xlane.xlu0 %1260
    %1262 = vadd.xlane.f32.xlu0 %v1208
    %v1263 = vpop.xlane.xlu0 %1262
    %1264 = vadd.xlane.f32.xlu0 %v1209
    %v1265 = vpop.xlane.xlu0 %1264
    %1266 = vadd.xlane.f32.xlu0 %v1210
    %v1267 = vpop.xlane.xlu0 %1266
    %1268 = vadd.xlane.f32.xlu0 %v1211
    %v1269 = vpop.xlane.xlu0 %1268
    %1270 = vadd.xlane.f32.xlu0 %v1212
    %v1271 = vpop.xlane.xlu0 %1270
    %1272 = vadd.xlane.f32.xlu0 %v1213
    %v1273 = vpop.xlane.xlu0 %1272
    %1274 = vadd.xlane.f32.xlu0 %v1214
    %v1275 = vpop.xlane.xlu0 %1274
    %1276 = vadd.xlane.f32.xlu0 %v1215
    %v1277 = vpop.xlane.xlu0 %1276
    %1278 = vadd.xlane.f32.xlu0 %v1216
    %v1279 = vpop.xlane.xlu0 %1278
    %1280 = vadd.xlane.f32.xlu0 %v1217
    %v1281 = vpop.xlane.xlu0 %1280
    %v1282 = vmul.f32 %v1123, 0.03125
    %v1283 = vmul.f32 %v1125, 0.03125
    %v1284 = vmul.f32 %v1127, 0.03125
    %v1285 = vmul.f32 %v1129, 0.03125
    %v1286 = vmul.f32 %v1131, 0.03125
    %v1287 = vmul.f32 %v1133, 0.03125
    %v1288 = vmul.f32 %v1135, 0.03125
    %v1289 = vmul.f32 %v1137, 0.03125
    %v1290 = vmul.f32 %v1139, 0.03125
    %v1291 = vmul.f32 %v1141, 0.03125
    %v1292 = vmul.f32 %v1143, 0.03125
    %v1293 = vmul.f32 %v1145, 0.03125
    %v1294 = vmul.f32 %v1147, 0.03125
    %v1295 = vmul.f32 %v1149, 0.03125
    %v1296 = vmul.f32 %v1151, 0.03125
    %v1297 = vmul.f32 %v1153, 0.03125
    %v1298 = vmul.f32 %v1155, 0.03125
    %v1299 = vmul.f32 %v1157, 0.03125
    %v1300 = vmul.f32 %v1159, 0.03125
    %v1301 = vmul.f32 %v1161, 0.03125
    %v1302 = vmul.f32 %v1163, 0.03125
    %v1303 = vmul.f32 %v1165, 0.03125
    %v1304 = vmul.f32 %v1167, 0.03125
    %v1305 = vmul.f32 %v1169, 0.03125
    %v1306 = vmul.f32 %v1171, 0.03125
    %v1307 = vmul.f32 %v1173, 0.03125
    %v1308 = vmul.f32 %v1175, 0.03125
    %v1309 = vmul.f32 %v1177, 0.03125
    %v1310 = vmul.f32 %v1179, 0.03125
    %v1311 = vmul.f32 %v1181, 0.03125
    %v1312 = vmul.f32 %v1183, 0.03125
    %v1313 = vmul.f32 %v1185, 0.03125
    %v1314 = vmul.f32 %v1219, 0.03125
    %v1315 = vmul.f32 %v1221, 0.03125
    %v1316 = vmul.f32 %v1223, 0.03125
    %v1317 = vmul.f32 %v1225, 0.03125
    %v1318 = vmul.f32 %v1227, 0.03125
    %v1319 = vmul.f32 %v1229, 0.03125
    %v1320 = vmul.f32 %v1231, 0.03125
    %v1321 = vmul.f32 %v1233, 0.03125
    %v1322 = vmul.f32 %v1235, 0.03125
    %v1323 = vmul.f32 %v1237, 0.03125
    %v1324 = vmul.f32 %v1239, 0.03125
    %v1325 = vmul.f32 %v1241, 0.03125
    %v1326 = vmul.f32 %v1243, 0.03125
    %v1327 = vmul.f32 %v1245, 0.03125
    %v1328 = vmul.f32 %v1247, 0.03125
    %v1329 = vmul.f32 %v1249, 0.03125
    %v1330 = vmul.f32 %v1251, 0.03125
    %v1331 = vmul.f32 %v1253, 0.03125
    %v1332 = vmul.f32 %v1255, 0.03125
    %v1333 = vmul.f32 %v1257, 0.03125
    %v1334 = vmul.f32 %v1259, 0.03125
    %v1335 = vmul.f32 %v1261, 0.03125
    %v1336 = vmul.f32 %v1263, 0.03125
    %v1337 = vmul.f32 %v1265, 0.03125
    %v1338 = vmul.f32 %v1267, 0.03125
    %v1339 = vmul.f32 %v1269, 0.03125
    %v1340 = vmul.f32 %v1271, 0.03125
    %v1341 = vmul.f32 %v1273, 0.03125
    %v1342 = vmul.f32 %v1275, 0.03125
    %v1343 = vmul.f32 %v1277, 0.03125
    %v1344 = vmul.f32 %v1279, 0.03125
    %v1345 = vmul.f32 %v1281, 0.03125
    %v1346 = vmul.f32 %v1282, %v1282
    %v1347 = vmul.f32 %v1283, %v1283
    %v1348 = vmul.f32 %v1284, %v1284
    %v1349 = vmul.f32 %v1285, %v1285
    %v1350 = vmul.f32 %v1286, %v1286
    %v1351 = vmul.f32 %v1287, %v1287
    %v1352 = vmul.f32 %v1288, %v1288
    %v1353 = vmul.f32 %v1289, %v1289
    %v1354 = vmul.f32 %v1290, %v1290
    %v1355 = vmul.f32 %v1291, %v1291
    %v1356 = vmul.f32 %v1292, %v1292
    %v1357 = vmul.f32 %v1293, %v1293
    %v1358 = vmul.f32 %v1294, %v1294
    %v1359 = vmul.f32 %v1295, %v1295
    %v1360 = vmul.f32 %v1296, %v1296
    %v1361 = vmul.f32 %v1297, %v1297
    %v1362 = vmul.f32 %v1298, %v1298
    %v1363 = vmul.f32 %v1299, %v1299
    %v1364 = vmul.f32 %v1300, %v1300
    %v1365 = vmul.f32 %v1301, %v1301
    %v1366 = vmul.f32 %v1302, %v1302
    %v1367 = vmul.f32 %v1303, %v1303
    %v1368 = vmul.f32 %v1304, %v1304
    %v1369 = vmul.f32 %v1305, %v1305
    %v1370 = vmul.f32 %v1306, %v1306
    %v1371 = vmul.f32 %v1307, %v1307
    %v1372 = vmul.f32 %v1308, %v1308
    %v1373 = vmul.f32 %v1309, %v1309
    %v1374 = vmul.f32 %v1310, %v1310
    %v1375 = vmul.f32 %v1311, %v1311
    %v1376 = vmul.f32 %v1312, %v1312
    %v1377 = vmul.f32 %v1313, %v1313
    %v1378 = vsub.f32 %v1314, %v1346
    %v1379 = vsub.f32 %v1315, %v1347
    %v1380 = vsub.f32 %v1316, %v1348
    %v1381 = vsub.f32 %v1317, %v1349
    %v1382 = vsub.f32 %v1318, %v1350
    %v1383 = vsub.f32 %v1319, %v1351
    %v1384 = vsub.f32 %v1320, %v1352
    %v1385 = vsub.f32 %v1321, %v1353
    %v1386 = vsub.f32 %v1322, %v1354
    %v1387 = vsub.f32 %v1323, %v1355
    %v1388 = vsub.f32 %v1324, %v1356
    %v1389 = vsub.f32 %v1325, %v1357
    %v1390 = vsub.f32 %v1326, %v1358
    %v1391 = vsub.f32 %v1327, %v1359
    %v1392 = vsub.f32 %v1328, %v1360
    %v1393 = vsub.f32 %v1329, %v1361
    %v1394 = vsub.f32 %v1330, %v1362
    %v1395 = vsub.f32 %v1331, %v1363
    %v1396 = vsub.f32 %v1332, %v1364
    %v1397 = vsub.f32 %v1333, %v1365
    %v1398 = vsub.f32 %v1334, %v1366
    %v1399 = vsub.f32 %v1335, %v1367
    %v1400 = vsub.f32 %v1336, %v1368
    %v1401 = vsub.f32 %v1337, %v1369
    %v1402 = vsub.f32 %v1338, %v1370
    %v1403 = vsub.f32 %v1339, %v1371
    %v1404 = vsub.f32 %v1340, %v1372
    %v1405 = vsub.f32 %v1341, %v1373
    %v1406 = vsub.f32 %v1342, %v1374
    %v1407 = vsub.f32 %v1343, %v1375
    %v1408 = vsub.f32 %v1344, %v1376
    %v1409 = vsub.f32 %v1345, %v1377
    %v1410 = vmax.f32 %v1378, 0.0
    %v1411 = vmax.f32 %v1379, 0.0
    %v1412 = vmax.f32 %v1380, 0.0
    %v1413 = vmax.f32 %v1381, 0.0
    %v1414 = vmax.f32 %v1382, 0.0
    %v1415 = vmax.f32 %v1383, 0.0
    %v1416 = vmax.f32 %v1384, 0.0
    %v1417 = vmax.f32 %v1385, 0.0
    %v1418 = vmax.f32 %v1386, 0.0
    %v1419 = vmax.f32 %v1387, 0.0
    %v1420 = vmax.f32 %v1388, 0.0
    %v1421 = vmax.f32 %v1389, 0.0
    %v1422 = vmax.f32 %v1390, 0.0
    %v1423 = vmax.f32 %v1391, 0.0
    %v1424 = vmax.f32 %v1392, 0.0
    %v1425 = vmax.f32 %v1393, 0.0
    %v1426 = vmax.f32 %v1394, 0.0
    %v1427 = vmax.f32 %v1395, 0.0
    %v1428 = vmax.f32 %v1396, 0.0
    %v1429 = vmax.f32 %v1397, 0.0
    %v1430 = vmax.f32 %v1398, 0.0
    %v1431 = vmax.f32 %v1399, 0.0
    %v1432 = vmax.f32 %v1400, 0.0
    %v1433 = vmax.f32 %v1401, 0.0
    %v1434 = vmax.f32 %v1402, 0.0
    %v1435 = vmax.f32 %v1403, 0.0
    %v1436 = vmax.f32 %v1404, 0.0
    %v1437 = vmax.f32 %v1405, 0.0
    %v1438 = vmax.f32 %v1406, 0.0
    %v1439 = vmax.f32 %v1407, 0.0
    %v1440 = vmax.f32 %v1408, 0.0
    %v1441 = vmax.f32 %v1409, 0.0
    %v1442 = vadd.f32 %v1410, 1e-05
    %v1443 = vadd.f32 %v1411, 1e-05
    %v1444 = vadd.f32 %v1412, 1e-05
    %v1445 = vadd.f32 %v1413, 1e-05
    %v1446 = vadd.f32 %v1414, 1e-05
    %v1447 = vadd.f32 %v1415, 1e-05
    %v1448 = vadd.f32 %v1416, 1e-05
    %v1449 = vadd.f32 %v1417, 1e-05
    %v1450 = vadd.f32 %v1418, 1e-05
    %v1451 = vadd.f32 %v1419, 1e-05
    %v1452 = vadd.f32 %v1420, 1e-05
    %v1453 = vadd.f32 %v1421, 1e-05
    %v1454 = vadd.f32 %v1422, 1e-05
    %v1455 = vadd.f32 %v1423, 1e-05
    %v1456 = vadd.f32 %v1424, 1e-05
    %v1457 = vadd.f32 %v1425, 1e-05
    %v1458 = vadd.f32 %v1426, 1e-05
    %v1459 = vadd.f32 %v1427, 1e-05
    %v1460 = vadd.f32 %v1428, 1e-05
    %v1461 = vadd.f32 %v1429, 1e-05
    %v1462 = vadd.f32 %v1430, 1e-05
    %v1463 = vadd.f32 %v1431, 1e-05
    %v1464 = vadd.f32 %v1432, 1e-05
    %v1465 = vadd.f32 %v1433, 1e-05
    %v1466 = vadd.f32 %v1434, 1e-05
    %v1467 = vadd.f32 %v1435, 1e-05
    %v1468 = vadd.f32 %v1436, 1e-05
    %v1469 = vadd.f32 %v1437, 1e-05
    %v1470 = vadd.f32 %v1438, 1e-05
    %v1471 = vadd.f32 %v1439, 1e-05
    %v1472 = vadd.f32 %v1440, 1e-05
    %v1473 = vadd.f32 %v1441, 1e-05
    %v1474 = vrsqrt.pop %v1442
    %v1475 = vrsqrt.pop %v1443
    %v1476 = vrsqrt.pop %v1444
    %v1477 = vrsqrt.pop %v1445
    %v1478 = vrsqrt.pop %v1446
    %v1479 = vrsqrt.pop %v1447
    %v1480 = vrsqrt.pop %v1448
    %v1481 = vrsqrt.pop %v1449
    %v1482 = vrsqrt.pop %v1450
    %v1483 = vrsqrt.pop %v1451
    %v1484 = vrsqrt.pop %v1452
    %v1485 = vrsqrt.pop %v1453
    %v1486 = vrsqrt.pop %v1454
    %v1487 = vrsqrt.pop %v1455
    %v1488 = vrsqrt.pop %v1456
    %v1489 = vrsqrt.pop %v1457
    %v1490 = vrsqrt.pop %v1458
    %v1491 = vrsqrt.pop %v1459
    %v1492 = vrsqrt.pop %v1460
    %v1493 = vrsqrt.pop %v1461
    %v1494 = vrsqrt.pop %v1462
    %v1495 = vrsqrt.pop %v1463
    %v1496 = vrsqrt.pop %v1464
    %v1497 = vrsqrt.pop %v1465
    %v1498 = vrsqrt.pop %v1466
    %v1499 = vrsqrt.pop %v1467
    %v1500 = vrsqrt.pop %v1468
    %v1501 = vrsqrt.pop %v1469
    %v1502 = vrsqrt.pop %v1470
    %v1503 = vrsqrt.pop %v1471
    %v1504 = vrsqrt.pop %v1472
    %v1505 = vrsqrt.pop %v1473
    %v1506 = vsub.f32 %v996, %v1282
    %v1507 = vsub.f32 %v999, %v1283
    %v1508 = vsub.f32 %v1004, %v1284
    %v1509 = vsub.f32 %v1007, %v1285
    %v1510 = vsub.f32 %v1012, %v1286
    %v1511 = vsub.f32 %v1015, %v1287
    %v1512 = vsub.f32 %v1020, %v1288
    %v1513 = vsub.f32 %v1023, %v1289
    %v1514 = vsub.f32 %v1028, %v1290
    %v1515 = vsub.f32 %v1031, %v1291
    %v1516 = vsub.f32 %v1036, %v1292
    %v1517 = vsub.f32 %v1039, %v1293
    %v1518 = vsub.f32 %v1044, %v1294
    %v1519 = vsub.f32 %v1047, %v1295
    %v1520 = vsub.f32 %v1052, %v1296
    %v1521 = vsub.f32 %v1055, %v1297
    %v1522 = vsub.f32 %v1060, %v1298
    %v1523 = vsub.f32 %v1063, %v1299
    %v1524 = vsub.f32 %v1068, %v1300
    %v1525 = vsub.f32 %v1071, %v1301
    %v1526 = vsub.f32 %v1076, %v1302
    %v1527 = vsub.f32 %v1079, %v1303
    %v1528 = vsub.f32 %v1084, %v1304
    %v1529 = vsub.f32 %v1087, %v1305
    %v1530 = vsub.f32 %v1092, %v1306
    %v1531 = vsub.f32 %v1095, %v1307
    %v1532 = vsub.f32 %v1100, %v1308
    %v1533 = vsub.f32 %v1103, %v1309
    %v1534 = vsub.f32 %v1108, %v1310
    %v1535 = vsub.f32 %v1111, %v1311
    %v1536 = vsub.f32 %v1116, %v1312
    %v1537 = vsub.f32 %v1119, %v1313
    %v1538 = vmul.f32 %v1506, %v1474
    %v1539 = vmul.f32 %v1507, %v1475
    %v1540 = vmul.f32 %v1508, %v1476
    %v1541 = vmul.f32 %v1509, %v1477
    %v1542 = vmul.f32 %v1510, %v1478
    %v1543 = vmul.f32 %v1511, %v1479
    %v1544 = vmul.f32 %v1512, %v1480
    %v1545 = vmul.f32 %v1513, %v1481
    %v1546 = vmul.f32 %v1514, %v1482
    %v1547 = vmul.f32 %v1515, %v1483
    %v1548 = vmul.f32 %v1516, %v1484
    %v1549 = vmul.f32 %v1517, %v1485
    %v1550 = vmul.f32 %v1518, %v1486
    %v1551 = vmul.f32 %v1519, %v1487
    %v1552 = vmul.f32 %v1520, %v1488
    %v1553 = vmul.f32 %v1521, %v1489
    %v1554 = vmul.f32 %v1522, %v1490
    %v1555 = vmul.f32 %v1523, %v1491
    %v1556 = vmul.f32 %v1524, %v1492
    %v1557 = vmul.f32 %v1525, %v1493
    %v1558 = vmul.f32 %v1526, %v1494
    %v1559 = vmul.f32 %v1527, %v1495
    %v1560 = vmul.f32 %v1528, %v1496
    %v1561 = vmul.f32 %v1529, %v1497
    %v1562 = vmul.f32 %v1530, %v1498
    %v1563 = vmul.f32 %v1531, %v1499
    %v1564 = vmul.f32 %v1532, %v1500
    %v1565 = vmul.f32 %v1533, %v1501
    %v1566 = vmul.f32 %v1534, %v1502
    %v1567 = vmul.f32 %v1535, %v1503
    %v1568 = vmul.f32 %v1536, %v1504
    %v1569 = vmul.f32 %v1537, %v1505
    %v1570 = vld [vmem:[%s6] sm:$0x1]
    %v1572 = vlaneseq
    %v1573 = vshrl.u32 %v1572, 7
    %v1574 = vsub.s32 0, %v1573
    %v1575 = vrot.slane %v1570, %v1574
    %v1577 = vmul.f32 %v1538, %v1575
    %v1578 = vmul.f32 %v1539, %v1575
    %v1579 = vmul.f32 %v1540, %v1575
    %v1580 = vmul.f32 %v1541, %v1575
    %v1581 = vmul.f32 %v1542, %v1575
    %v1582 = vmul.f32 %v1543, %v1575
    %v1583 = vmul.f32 %v1544, %v1575
    %v1584 = vmul.f32 %v1545, %v1575
    %v1585 = vmul.f32 %v1546, %v1575
    %v1586 = vmul.f32 %v1547, %v1575
    %v1587 = vmul.f32 %v1548, %v1575
    %v1588 = vmul.f32 %v1549, %v1575
    %v1589 = vmul.f32 %v1550, %v1575
    %v1590 = vmul.f32 %v1551, %v1575
    %v1591 = vmul.f32 %v1552, %v1575
    %v1592 = vmul.f32 %v1553, %v1575
    %v1593 = vmul.f32 %v1554, %v1575
    %v1594 = vmul.f32 %v1555, %v1575
    %v1595 = vmul.f32 %v1556, %v1575
    %v1596 = vmul.f32 %v1557, %v1575
    %v1597 = vmul.f32 %v1558, %v1575
    %v1598 = vmul.f32 %v1559, %v1575
    %v1599 = vmul.f32 %v1560, %v1575
    %v1600 = vmul.f32 %v1561, %v1575
    %v1601 = vmul.f32 %v1562, %v1575
    %v1602 = vmul.f32 %v1563, %v1575
    %v1603 = vmul.f32 %v1564, %v1575
    %v1604 = vmul.f32 %v1565, %v1575
    %v1605 = vmul.f32 %v1566, %v1575
    %v1606 = vmul.f32 %v1567, %v1575
    %v1607 = vmul.f32 %v1568, %v1575
    %v1608 = vmul.f32 %v1569, %v1575
    %v1609 = vld [vmem:[%s7] sm:$0x1]
    %v1611 = vlaneseq
    %v1612 = vshrl.u32 %v1611, 7
    %v1613 = vsub.s32 0, %v1612
    %v1614 = vrot.slane %v1609, %v1613
    %v1616 = vadd.f32 %v1577, %v1614
    %v1617 = vadd.f32 %v1578, %v1614
    %v1618 = vadd.f32 %v1579, %v1614
    %v1619 = vadd.f32 %v1580, %v1614
    %v1620 = vadd.f32 %v1581, %v1614
    %v1621 = vadd.f32 %v1582, %v1614
    %v1622 = vadd.f32 %v1583, %v1614
    %v1623 = vadd.f32 %v1584, %v1614
    %v1624 = vadd.f32 %v1585, %v1614
    %v1625 = vadd.f32 %v1586, %v1614
    %v1626 = vadd.f32 %v1587, %v1614
    %v1627 = vadd.f32 %v1588, %v1614
    %v1628 = vadd.f32 %v1589, %v1614
    %v1629 = vadd.f32 %v1590, %v1614
    %v1630 = vadd.f32 %v1591, %v1614
    %v1631 = vadd.f32 %v1592, %v1614
    %v1632 = vadd.f32 %v1593, %v1614
    %v1633 = vadd.f32 %v1594, %v1614
    %v1634 = vadd.f32 %v1595, %v1614
    %v1635 = vadd.f32 %v1596, %v1614
    %v1636 = vadd.f32 %v1597, %v1614
    %v1637 = vadd.f32 %v1598, %v1614
    %v1638 = vadd.f32 %v1599, %v1614
    %v1639 = vadd.f32 %v1600, %v1614
    %v1640 = vadd.f32 %v1601, %v1614
    %v1641 = vadd.f32 %v1602, %v1614
    %v1642 = vadd.f32 %v1603, %v1614
    %v1643 = vadd.f32 %v1604, %v1614
    %v1644 = vadd.f32 %v1605, %v1614
    %v1645 = vadd.f32 %v1606, %v1614
    %v1646 = vadd.f32 %v1607, %v1614
    %v1647 = vadd.f32 %v1608, %v1614
    %1648 = vst [vmem:[#allocation2] sm:$0xff] %v1616
    %1649 = vst [vmem:[#allocation2 + $0x8] sm:$0xff] %v1617
    %1650 = vst [vmem:[#allocation2 + $0x10] sm:$0xff] %v1618
    %1651 = vst [vmem:[#allocation2 + $0x18] sm:$0xff] %v1619
    %1652 = vst [vmem:[#allocation2 + $0x20] sm:$0xff] %v1620
    %1653 = vst [vmem:[#allocation2 + $0x28] sm:$0xff] %v1621
    %1654 = vst [vmem:[#allocation2 + $0x30] sm:$0xff] %v1622
    %1655 = vst [vmem:[#allocation2 + $0x38] sm:$0xff] %v1623
    %1656 = vst [vmem:[#allocation2 + $0x40] sm:$0xff] %v1624
    %1657 = vst [vmem:[#allocation2 + $0x48] sm:$0xff] %v1625
    %1658 = vst [vmem:[#allocation2 + $0x50] sm:$0xff] %v1626
    %1659 = vst [vmem:[#allocation2 + $0x58] sm:$0xff] %v1627
    %1660 = vst [vmem:[#allocation2 + $0x60] sm:$0xff] %v1628
    %1661 = vst [vmem:[#allocation2 + $0x68] sm:$0xff] %v1629
    %1662 = vst [vmem:[#allocation2 + $0x70] sm:$0xff] %v1630
    %1663 = vst [vmem:[#allocation2 + $0x78] sm:$0xff] %v1631
    %1664 = vst [vmem:[#allocation2 + $0x80] sm:$0xff] %v1632
    %1665 = vst [vmem:[#allocation2 + $0x88] sm:$0xff] %v1633
    %1666 = vst [vmem:[#allocation2 + $0x90] sm:$0xff] %v1634
    %1667 = vst [vmem:[#allocation2 + $0x98] sm:$0xff] %v1635
    %1668 = vst [vmem:[#allocation2 + $0xa0] sm:$0xff] %v1636
    %1669 = vst [vmem:[#allocation2 + $0xa8] sm:$0xff] %v1637
    %1670 = vst [vmem:[#allocation2 + $0xb0] sm:$0xff] %v1638
    %1671 = vst [vmem:[#allocation2 + $0xb8] sm:$0xff] %v1639
    %1672 = vst [vmem:[#allocation2 + $0xc0] sm:$0xff] %v1640
    %1673 = vst [vmem:[#allocation2 + $0xc8] sm:$0xff] %v1641
    %1674 = vst [vmem:[#allocation2 + $0xd0] sm:$0xff] %v1642
    %1675 = vst [vmem:[#allocation2 + $0xd8] sm:$0xff] %v1643
    %1676 = vst [vmem:[#allocation2 + $0xe0] sm:$0xff] %v1644
    %1677 = vst [vmem:[#allocation2 + $0xe8] sm:$0xff] %v1645
    %1678 = vst [vmem:[#allocation2 + $0xf0] sm:$0xff] %v1646
    %1679 = vst [vmem:[#allocation2 + $0xf8] sm:$0xff] %v1647
    // Predicated region
    $region34: #{tpu_custom_call.1} parent=1 // pred_check
      _
    $region35: #{tpu_custom_call.1} parent=1 // pred_check_branch
      %1681 = sbr.rel (0) target = $region37
    $region36: #{tpu_custom_call.1} parent=1 // pred_region
      %s1683 = ssub.s32 4096, 4096
      %1684 = vsyncadd [#allocation3], %s1683
      %s1685 = sshll.u32 [#allocation2], 4
      %s1686 = int_to_ptr.vmem [resolvable:$true] %s1685
      %1691 = dma.vmem_to_hbm [thread:$0]  %s1686, 4096, %s8, [#allocation3], 128, 128, 8
    $region37: #{tpu_custom_call.1} parent=1 // pred_fallthru
      _
    // Predicated region
    $region38: #{tpu_custom_call.1} parent=1 // pred_check
      _
    $region39: #{tpu_custom_call.1} parent=1 // pred_check_branch
      %1693 = sbr.rel (0) target = $region41
    $region40: #{tpu_custom_call.1} parent=1 // pred_region
      %1694 = dma.done [#allocation3], 4096
    $region41: #{tpu_custom_call.1} parent=1 // pred_fallthru
      _
    %1695 = vsyncpa [#allocation3], 1

</llo_original>
